<compile_context>
chip_gen: v5e
topology: v5e:2x2
jax: 0.10.0
libtpu: 0.0.40
codegen_flags: <defaults>
</compile_context>

<pallas_src>
import jax
import jax.numpy as jnp
import numpy as np
from jax import lax
from jax.experimental import pallas as pl
from jax.experimental.pallas import tpu as pltpu


def _regression_head_kernel(
    x_ref,            # VMEM (TB*H, W*Cin)        packed interleaved input rows
    s1_ref, t1_ref,   # VMEM (1, W*Cin)           folded BN1 scale / shift
    bw_ref,           # VMEM (3*W*Cin, W*Ch)      banded 3x3 conv weights (K-fused)
    s2_ref, t2_ref,   # VMEM (1, W*Ch)            folded BN2 scale / shift
    kr_ref,           # VMEM (W*Ch, 2*W*sf)       1x1 conv + col-upsample, both channels
    b2_ref,           # VMEM (1, 2*W*sf)          conv2 bias row
    rh_ref,           # VMEM (H*sf, H)            row-replication matrix
    o_ref,            # VMEM (TB, 2, H*sf, W*sf)  packed upsampled output
    cat_ref,          # VMEM scratch (TB*H, 3*W*Cin)
):
    M, WC = x_ref.shape
    TB = o_ref.shape[0]
    H = M // TB
    Wsf = o_ref.shape[3]

    # ---- BN1 -> ReLU (VPU, lane-dense)
    a1 = jnp.maximum(x_ref[...] * s1_ref[...] + t1_ref[...], 0.0)        # (M, WC)

    # ---- image-local row shifts: XLU roll + per-image boundary mask
    ri = lax.broadcasted_iota(jnp.int32, (M, 1), 0) % H                  # row-in-image
    a_up = jnp.where(ri > 0, pltpu.roll(a1, 1, 0), 0.0)                  # a1[i-1]
    a_dn = jnp.where(ri < H - 1, pltpu.roll(a1, M - 1, 0), 0.0)          # a1[i+1]

    # Stage the 3 shifted copies side-by-side (VMEM scratch -> one K=192 matmul).
    cat_ref[:, :WC] = a_up
    cat_ref[:, WC:2 * WC] = a1
    cat_ref[:, 2 * WC:] = a_dn

    # ---- Conv 3x3 as a single MXU matmul (K = 3*W*Cin).
    h = jnp.dot(cat_ref[...], bw_ref[...],
                preferred_element_type=jnp.float32)                      # (M, W*Ch)

    # ---- BN2 -> ReLU
    a2 = jnp.maximum(h * s2_ref[...] + t2_ref[...], 0.0)                 # (M, W*Ch)

    # ---- 1x1 conv (both out channels) + column x sf upsample + bias, fused.
    #      N = 2*W*sf (= 256 here), bias added on the small pre-upsample tile.
    t = jnp.dot(a2, kr_ref[...],
                preferred_element_type=jnp.float32) + b2_ref[...]        # (M, 2*W*sf)

    # ---- Row x sf upsample per image; lane-dense (H*sf, W*sf) output stores.
    rh = rh_ref[...]                                                     # (H*sf, H)
    for b in range(TB):
        u = jnp.dot(rh, t[b * H:(b + 1) * H, :],
                    preferred_element_type=jnp.float32)                  # (H*sf, 2*W*sf)
        o_ref[b, 0] = u[:, :Wsf]
        o_ref[b, 1] = u[:, Wsf:]


def _pick_tb(B, H, max_rows=128):
    """Images per grid step: fill M<=128 rows but keep >=2 grid steps (v7x)."""
    tb = max(1, min(B, max(1, max_rows // H)))
    if B >= 2:
        tb = min(tb, pl.cdiv(B, 2))
    while B % tb:          # avoid padding: largest divisor of B <= tb
        tb -= 1
    return tb


def regression_head_forward(x, params, scale_factor=8):
    """x: (B, Cin, H, W) f32 -> (B, 2, H*sf, W*sf) f32 (sf=1 if scale_factor is None)."""
    B, Cin, H, W = x.shape
    Ch = params["conv1_w"].shape[0]
    sf = 1 if scale_factor is None else int(scale_factor)
    eps = 1e-5
    f32 = jnp.float32

    # Fold BatchNorm (inference mode) into per-channel scale/shift.
    s1 = params["bn1_gamma"] / jnp.sqrt(params["bn1_var"] + eps)
    t1 = params["bn1_beta"] - params["bn1_mean"] * s1
    s2 = params["bn2_gamma"] / jnp.sqrt(params["bn2_var"] + eps)
    t2 = params["bn2_beta"] - params["bn2_mean"] * s2

    TB = _pick_tb(B, H)
    G = B // TB
    M = TB * H
    WC, WCh, Wsf, Hsf = W * Cin, W * Ch, W * sf, H * sf

    # Channels-last interleaved, batch rows packed: row b*H+i, lane j*Cin+ci = x[b,ci,i,j].
    x_il = jnp.transpose(x, (0, 2, 3, 1)).reshape(B * H, WC).astype(f32)

    # Per-lane BN params tiled to the interleaved layout.
    s1t = jnp.tile(s1.astype(f32), W)[None, :]          # (1, W*Cin)
    t1t = jnp.tile(t1.astype(f32), W)[None, :]
    s2t = jnp.tile(s2.astype(f32), W)[None, :]          # (1, W*Ch)
    t2t = jnp.tile(t2.astype(f32), W)[None, :]

    # Banded conv1 weights, K-fused over the 3 row offsets:
    # bw[di*W*Cin + j'*Cin+ci, j*Ch+co] = w1[co, ci, di, (j'-j)+1] for |j'-j|<=1 else 0.
    w1 = params["conv1_w"].astype(f32)                  # (Ch, Cin, 3, 3) OIHW
    bw = jnp.concatenate([
        sum(jnp.kron(jnp.eye(W, k=-dc, dtype=f32), w1[:, :, di, dc + 1].T)
            for dc in (-1, 0, 1))
        for di in range(3)
    ], axis=0)                                          # (3*W*Cin, W*Ch)

    # conv2 (1x1), both output channels, fused with column replication x sf:
    # kr[j*Ch+co, c*W*sf + j2*sf + s] = w2[c, co] * 1[j == j2]
    w2 = params["conv2_w"].astype(f32)                  # (2, Ch)
    kr = jnp.concatenate([
        jnp.kron(jnp.eye(W, dtype=f32), jnp.outer(w2[c], jnp.ones((sf,), f32)))
        for c in range(2)
    ], axis=1)                                          # (W*Ch, 2*W*sf)

    # conv2 bias as a lane-dense row matching kr's column order.
    b2_row = jnp.repeat(params["conv2_b"].astype(f32), Wsf)[None, :]   # (1, 2*W*sf)

    # Row replication x sf (applied per image inside the kernel).
    rh = jnp.repeat(jnp.eye(H, dtype=f32), sf, axis=0)  # (H*sf, H)

    grid_spec = pltpu.PrefetchScalarGridSpec(
        num_scalar_prefetch=0,
        grid=(G,),
        in_specs=[
            pl.BlockSpec((M, WC), lambda b: (b, 0)),
            pl.BlockSpec((1, WC), lambda b: (0, 0)),
            pl.BlockSpec((1, WC), lambda b: (0, 0)),
            pl.BlockSpec((3 * WC, WCh), lambda b: (0, 0)),
            pl.BlockSpec((1, WCh), lambda b: (0, 0)),
            pl.BlockSpec((1, WCh), lambda b: (0, 0)),
            pl.BlockSpec((WCh, 2 * Wsf), lambda b: (0, 0)),
            pl.BlockSpec((1, 2 * Wsf), lambda b: (0, 0)),
            pl.BlockSpec((Hsf, H), lambda b: (0, 0)),
        ],
        out_specs=pl.BlockSpec((TB, 2, Hsf, Wsf), lambda b: (b, 0, 0, 0)),
        scratch_shapes=[pltpu.VMEM((M, 3 * WC), jnp.float32)],
    )

    out = pl.pallas_call(
        _regression_head_kernel,
        out_shape=jax.ShapeDtypeStruct((B, 2, Hsf, Wsf), f32),
        grid_spec=grid_spec,
        compiler_params=pltpu.CompilerParams(
            dimension_semantics=("parallel",)),          # megacore-friendly on v7x
    )(x_il, s1t, t1t, bw, s2t, t2t, kr, b2_row, rh)
    return out


def reference_forward(x, params, scale_factor=8):
    """Pure-JAX reference (lax.conv) for validation."""
    eps = 1e-5
    s1 = params["bn1_gamma"] / jnp.sqrt(params["bn1_var"] + eps)
    t1 = params["bn1_beta"] - params["bn1_mean"] * s1
    a1 = jnp.maximum(x * s1[None, :, None, None] + t1[None, :, None, None], 0.0)
    h = lax.conv_general_dilated(
        a1, params["conv1_w"], window_strides=(1, 1), padding=((1, 1), (1, 1)),
        dimension_numbers=("NCHW", "OIHW", "NCHW"))
    s2 = params["bn2_gamma"] / jnp.sqrt(params["bn2_var"] + eps)
    t2 = params["bn2_beta"] - params["bn2_mean"] * s2
    a2 = jnp.maximum(h * s2[None, :, None, None] + t2[None, :, None, None], 0.0)
    w2 = params["conv2_w"][:, :, None, None]
    y = lax.conv_general_dilated(
        a2, w2, window_strides=(1, 1), padding=((0, 0), (0, 0)),
        dimension_numbers=("NCHW", "OIHW", "NCHW"))
    y = y + params["conv2_b"][None, :, None, None]
    if scale_factor is not None:
        y = jnp.repeat(jnp.repeat(y, scale_factor, axis=2), scale_factor, axis=3)
    return y


def make_params(key, in_channels, head_channels):
    ks = jax.random.split(key, 10)
    return {
        "bn1_gamma": 1.0 + 0.1 * jax.random.normal(ks[0], (in_channels,), jnp.float32),
        "bn1_beta": 0.1 * jax.random.normal(ks[1], (in_channels,), jnp.float32),
        "bn1_mean": 0.1 * jax.random.normal(ks[2], (in_channels,), jnp.float32),
        "bn1_var": 0.5 + jnp.abs(jax.random.normal(ks[3], (in_channels,), jnp.float32)),
        "conv1_w": 0.2 * jax.random.normal(
            ks[4], (head_channels, in_channels, 3, 3), jnp.float32),
        "bn2_gamma": 1.0 + 0.1 * jax.random.normal(ks[5], (head_channels,), jnp.float32),
        "bn2_beta": 0.1 * jax.random.normal(ks[6], (head_channels,), jnp.float32),
        "bn2_mean": 0.1 * jax.random.normal(ks[7], (head_channels,), jnp.float32),
        "bn2_var": 0.5 + jnp.abs(jax.random.normal(ks[8], (head_channels,), jnp.float32)),
        "conv2_w": 0.2 * jax.random.normal(ks[9], (2, head_channels), jnp.float32),
        "conv2_b": jnp.arange(2, dtype=jnp.float32) * 0.05 + 0.01,
    }


if __name__ == "__main__":
    key = jax.random.PRNGKey(0)
    k_x, k_p = jax.random.split(key)

    B, Cin, H, W = 8, 4, 16, 16      # B=8 so batch packing (TB=4) keeps 2 grid steps
    Ch = 8
    scale_factor = 8

    x = jax.random.normal(k_x, (B, Cin, H, W), jnp.float32)
    params = make_params(k_p, Cin, Ch)

    out = jax.block_until_ready(regression_head_forward(x, params, scale_factor=scale_factor))
    ref = jax.block_until_ready(reference_forward(x, params, scale_factor=scale_factor))

    assert out.shape == (B, 2, H * scale_factor, W * scale_factor), out.shape
    max_err = float(np.max(np.abs(np.asarray(out) - np.asarray(ref))))
    assert np.allclose(np.asarray(out), np.asarray(ref), atol=2e-4, rtol=2e-4), (
        "mismatch vs reference, max abs err = %g" % max_err)

    print("KERNEL_OK")
</pallas_src>

<mosaic_0001>
module attributes {stable_mosaic.version = 11 : i64} {
  func.func @_regression_head_kernel(%arg0: i32, %arg1: memref<64x64xf32, #tpu.memory_space<vmem>>, %arg2: memref<1x64xf32, #tpu.memory_space<vmem>>, %arg3: memref<1x64xf32, #tpu.memory_space<vmem>>, %arg4: memref<192x128xf32, #tpu.memory_space<vmem>>, %arg5: memref<1x128xf32, #tpu.memory_space<vmem>>, %arg6: memref<1x128xf32, #tpu.memory_space<vmem>>, %arg7: memref<128x256xf32, #tpu.memory_space<vmem>>, %arg8: memref<1x256xf32, #tpu.memory_space<vmem>>, %arg9: memref<128x16xf32, #tpu.memory_space<vmem>>, %arg10: memref<4x2x128x128xf32, #tpu.memory_space<vmem>>, %arg11: memref<64x192xf32, #tpu.memory_space<vmem>>) attributes {dimension_semantics = [#tpu.dimension_semantics<parallel>], iteration_bounds = array<i64: 2>, scalar_prefetch = 0 : i64, scratch_operands = 1 : i64, tpu.core_type = #tpu.core_type<tc>, window_params = [{transform_indices = @transform_0, window_bounds = array<i64: 64, 64>}, {pipeline_mode = #tpu.pipeline_mode<synchronous>, transform_indices = @transform_1, window_bounds = array<i64: 1, 64>}, {pipeline_mode = #tpu.pipeline_mode<synchronous>, transform_indices = @transform_2, window_bounds = array<i64: 1, 64>}, {pipeline_mode = #tpu.pipeline_mode<synchronous>, transform_indices = @transform_3, window_bounds = array<i64: 192, 128>}, {pipeline_mode = #tpu.pipeline_mode<synchronous>, transform_indices = @transform_4, window_bounds = array<i64: 1, 128>}, {pipeline_mode = #tpu.pipeline_mode<synchronous>, transform_indices = @transform_5, window_bounds = array<i64: 1, 128>}, {pipeline_mode = #tpu.pipeline_mode<synchronous>, transform_indices = @transform_6, window_bounds = array<i64: 128, 256>}, {pipeline_mode = #tpu.pipeline_mode<synchronous>, transform_indices = @transform_7, window_bounds = array<i64: 1, 256>}, {pipeline_mode = #tpu.pipeline_mode<synchronous>, transform_indices = @transform_8, window_bounds = array<i64: 128, 16>}, {transform_indices = @transform_9, window_bounds = array<i64: 4, 2, 128, 128>}]} {
    %c0 = arith.constant 0 : index
    %c0_0 = arith.constant 0 : index
    %0 = vector.load %arg1[%c0, %c0_0] : memref<64x64xf32, #tpu.memory_space<vmem>>, vector<64x64xf32>
    %c0_1 = arith.constant 0 : index
    %c0_2 = arith.constant 0 : index
    %1 = vector.load %arg2[%c0_1, %c0_2] : memref<1x64xf32, #tpu.memory_space<vmem>>, vector<1x64xf32>
    %2 = vector.broadcast %1 : vector<1x64xf32> to vector<64x64xf32>
    %3 = arith.mulf %0, %2 : vector<64x64xf32>
    %c0_3 = arith.constant 0 : index
    %c0_4 = arith.constant 0 : index
    %4 = vector.load %arg3[%c0_3, %c0_4] : memref<1x64xf32, #tpu.memory_space<vmem>>, vector<1x64xf32>
    %5 = vector.broadcast %4 : vector<1x64xf32> to vector<64x64xf32>
    %6 = arith.addf %3, %5 : vector<64x64xf32>
    %cst = arith.constant 0.000000e+00 : f32
    %7 = vector.broadcast %cst : f32 to vector<64x64xf32>
    %8 = arith.maximumf %6, %7 : vector<64x64xf32>
    %9 = tpu.iota {dimensions = array<i32: 0>} : vector<64x1xi32>
    %c16_i32 = arith.constant 16 : i32
    %c0_i32 = arith.constant 0 : i32
    %10 = arith.cmpi eq, %c16_i32, %c0_i32 : i32
    %c1_i32 = arith.constant 1 : i32
    %11 = arith.select %10, %c1_i32, %c16_i32 : i32
    %12 = vector.broadcast %11 : i32 to vector<64x1xi32>
    %13 = arith.remsi %9, %12 : vector<64x1xi32>
    %c0_i32_5 = arith.constant 0 : i32
    %14 = vector.broadcast %c0_i32_5 : i32 to vector<64x1xi32>
    %15 = arith.cmpi ne, %13, %14 : vector<64x1xi32>
    %c0_i32_6 = arith.constant 0 : i32
    %16 = vector.broadcast %c0_i32_6 : i32 to vector<64x1xi32>
    %17 = arith.cmpi slt, %13, %16 : vector<64x1xi32>
    %c0_i32_7 = arith.constant 0 : i32
    %18 = arith.cmpi slt, %11, %c0_i32_7 : i32
    %19 = vector.broadcast %18 : i1 to vector<64x1xi1>
    %20 = vector.broadcast %19 : vector<64x1xi1> to vector<64x1xi1>
    %21 = arith.xori %17, %20 : vector<64x1xi1>
    %22 = arith.andi %21, %15 : vector<64x1xi1>
    %23 = vector.broadcast %11 : i32 to vector<64x1xi32>
    %24 = arith.addi %13, %23 : vector<64x1xi32>
    %25 = arith.select %22, %24, %13 : vector<64x1xi1>, vector<64x1xi32>
    %c0_i32_8 = arith.constant 0 : i32
    %26 = vector.broadcast %c0_i32_8 : i32 to vector<64x1xi32>
    %27 = arith.cmpi sgt, %25, %26 : vector<64x1xi32>
    %c1_i32_9 = arith.constant 1 : i32
    %28 = tpu.dynamic_rotate %8 by %c1_i32_9 dim 0 : vector<64x64xf32>, i32 -> vector<64x64xf32>
    %cst_10 = arith.constant 0.000000e+00 : f32
    %29 = vector.shape_cast %27 : vector<64x1xi1> to vector<64x1xi1>
    %30 = vector.broadcast %29 : vector<64x1xi1> to vector<64x64xi1>
    %31 = vector.broadcast %cst_10 : f32 to vector<64x64xf32>
    %32 = arith.select %30, %28, %31 : vector<64x64xi1>, vector<64x64xf32>
    %c15_i32 = arith.constant 15 : i32
    %33 = vector.broadcast %c15_i32 : i32 to vector<64x1xi32>
    %34 = arith.cmpi slt, %25, %33 : vector<64x1xi32>
    %c63_i32 = arith.constant 63 : i32
    %35 = tpu.dynamic_rotate %8 by %c63_i32 dim 0 : vector<64x64xf32>, i32 -> vector<64x64xf32>
    %cst_11 = arith.constant 0.000000e+00 : f32
    %36 = vector.shape_cast %34 : vector<64x1xi1> to vector<64x1xi1>
    %37 = vector.broadcast %36 : vector<64x1xi1> to vector<64x64xi1>
    %38 = vector.broadcast %cst_11 : f32 to vector<64x64xf32>
    %39 = arith.select %37, %35, %38 : vector<64x64xi1>, vector<64x64xf32>
    %c0_12 = arith.constant 0 : index
    %c0_13 = arith.constant 0 : index
    %40 = vector.load %arg11[%c0_12, %c0_13] : memref<64x192xf32, #tpu.memory_space<vmem>>, vector<64x64xf32>
    tpu.vector_store %arg11[%c0_12, %c0_13], %32 {strides = array<i32>} : memref<64x192xf32, #tpu.memory_space<vmem>>, vector<64x64xf32>,
    %c0_14 = arith.constant 0 : index
    %c64 = arith.constant 64 : index
    %41 = vector.load %arg11[%c0_14, %c64] : memref<64x192xf32, #tpu.memory_space<vmem>>, vector<64x64xf32>
    tpu.vector_store %arg11[%c0_14, %c64], %8 {strides = array<i32>} : memref<64x192xf32, #tpu.memory_space<vmem>>, vector<64x64xf32>,
    %c0_15 = arith.constant 0 : index
    %c128 = arith.constant 128 : index
    %42 = vector.load %arg11[%c0_15, %c128] : memref<64x192xf32, #tpu.memory_space<vmem>>, vector<64x64xf32>
    tpu.vector_store %arg11[%c0_15, %c128], %39 {strides = array<i32>} : memref<64x192xf32, #tpu.memory_space<vmem>>, vector<64x64xf32>,
    %c0_16 = arith.constant 0 : index
    %c0_17 = arith.constant 0 : index
    %43 = vector.load %arg11[%c0_16, %c0_17] : memref<64x192xf32, #tpu.memory_space<vmem>>, vector<64x192xf32>
    %c0_18 = arith.constant 0 : index
    %c0_19 = arith.constant 0 : index
    %44 = vector.load %arg4[%c0_18, %c0_19] : memref<192x128xf32, #tpu.memory_space<vmem>>, vector<192x128xf32>
    %cst_20 = arith.constant dense<0.000000e+00> : vector<64x128xf32>
    %45 = tpu.matmul %43, %44, %cst_20 {dimension_numbers = #tpu.dot_dimension_numbers<[1], [0], [0], [1], [0, 0, 1, 1], [], []>} : vector<64x192xf32>, vector<192x128xf32>, vector<64x128xf32> -> vector<64x128xf32>
    %c0_21 = arith.constant 0 : index
    %c0_22 = arith.constant 0 : index
    %46 = vector.load %arg5[%c0_21, %c0_22] : memref<1x128xf32, #tpu.memory_space<vmem>>, vector<1x128xf32>
    %47 = vector.broadcast %46 : vector<1x128xf32> to vector<64x128xf32>
    %48 = arith.mulf %45, %47 : vector<64x128xf32>
    %c0_23 = arith.constant 0 : index
    %c0_24 = arith.constant 0 : index
    %49 = vector.load %arg6[%c0_23, %c0_24] : memref<1x128xf32, #tpu.memory_space<vmem>>, vector<1x128xf32>
    %50 = vector.broadcast %49 : vector<1x128xf32> to vector<64x128xf32>
    %51 = arith.addf %48, %50 : vector<64x128xf32>
    %cst_25 = arith.constant 0.000000e+00 : f32
    %52 = vector.broadcast %cst_25 : f32 to vector<64x128xf32>
    %53 = arith.maximumf %51, %52 : vector<64x128xf32>
    %c0_26 = arith.constant 0 : index
    %c0_27 = arith.constant 0 : index
    %54 = vector.load %arg7[%c0_26, %c0_27] : memref<128x256xf32, #tpu.memory_space<vmem>>, vector<128x256xf32>
    %cst_28 = arith.constant dense<0.000000e+00> : vector<64x256xf32>
    %55 = tpu.matmul %53, %54, %cst_28 {dimension_numbers = #tpu.dot_dimension_numbers<[1], [0], [0], [1], [0, 0, 1, 1], [], []>} : vector<64x128xf32>, vector<128x256xf32>, vector<64x256xf32> -> vector<64x256xf32>
    %c0_29 = arith.constant 0 : index
    %c0_30 = arith.constant 0 : index
    %56 = vector.load %arg8[%c0_29, %c0_30] : memref<1x256xf32, #tpu.memory_space<vmem>>, vector<1x256xf32>
    %57 = vector.broadcast %56 : vector<1x256xf32> to vector<64x256xf32>
    %58 = arith.addf %55, %57 : vector<64x256xf32>
    %c0_31 = arith.constant 0 : index
    %c0_32 = arith.constant 0 : index
    %59 = vector.load %arg9[%c0_31, %c0_32] : memref<128x16xf32, #tpu.memory_space<vmem>>, vector<128x16xf32>
    %60 = vector.extract_strided_slice %58 {offsets = [0, 0], sizes = [16, 256], strides = [1, 1]} : vector<64x256xf32> to vector<16x256xf32>
    %cst_33 = arith.constant dense<0.000000e+00> : vector<128x256xf32>
    %61 = tpu.matmul %59, %60, %cst_33 {dimension_numbers = #tpu.dot_dimension_numbers<[1], [0], [0], [1], [0, 0, 1, 1], [], []>} : vector<128x16xf32>, vector<16x256xf32>, vector<128x256xf32> -> vector<128x256xf32>
    %62 = vector.extract_strided_slice %61 {offsets = [0, 0], sizes = [128, 128], strides = [1, 1]} : vector<128x256xf32> to vector<128x128xf32>
    %c0_34 = arith.constant 0 : index
    %c0_35 = arith.constant 0 : index
    %c0_36 = arith.constant 0 : index
    %c0_37 = arith.constant 0 : index
    %63 = vector.load %arg10[%c0_34, %c0_35, %c0_36, %c0_37] : memref<4x2x128x128xf32, #tpu.memory_space<vmem>>, vector<1x1x128x128xf32>
    %64 = vector.shape_cast %63 : vector<1x1x128x128xf32> to vector<128x128xf32>
    %65 = vector.shape_cast %62 : vector<128x128xf32> to vector<1x1x128x128xf32>
    tpu.vector_store %arg10[%c0_34, %c0_35, %c0_36, %c0_37], %65 {strides = array<i32>} : memref<4x2x128x128xf32, #tpu.memory_space<vmem>>, vector<1x1x128x128xf32>,
    %66 = vector.extract_strided_slice %61 {offsets = [0, 128], sizes = [128, 128], strides = [1, 1]} : vector<128x256xf32> to vector<128x128xf32>
    %c0_38 = arith.constant 0 : index
    %c1 = arith.constant 1 : index
    %c0_39 = arith.constant 0 : index
    %c0_40 = arith.constant 0 : index
    %67 = vector.load %arg10[%c0_38, %c1, %c0_39, %c0_40] : memref<4x2x128x128xf32, #tpu.memory_space<vmem>>, vector<1x1x128x128xf32>
    %68 = vector.shape_cast %67 : vector<1x1x128x128xf32> to vector<128x128xf32>
    %69 = vector.shape_cast %66 : vector<128x128xf32> to vector<1x1x128x128xf32>
    tpu.vector_store %arg10[%c0_38, %c1, %c0_39, %c0_40], %69 {strides = array<i32>} : memref<4x2x128x128xf32, #tpu.memory_space<vmem>>, vector<1x1x128x128xf32>,
    %70 = vector.extract_strided_slice %58 {offsets = [16, 0], sizes = [16, 256], strides = [1, 1]} : vector<64x256xf32> to vector<16x256xf32>
    %cst_41 = arith.constant dense<0.000000e+00> : vector<128x256xf32>
    %71 = tpu.matmul %59, %70, %cst_41 {dimension_numbers = #tpu.dot_dimension_numbers<[1], [0], [0], [1], [0, 0, 1, 1], [], []>} : vector<128x16xf32>, vector<16x256xf32>, vector<128x256xf32> -> vector<128x256xf32>
    %72 = vector.extract_strided_slice %71 {offsets = [0, 0], sizes = [128, 128], strides = [1, 1]} : vector<128x256xf32> to vector<128x128xf32>
    %c1_42 = arith.constant 1 : index
    %c0_43 = arith.constant 0 : index
    %c0_44 = arith.constant 0 : index
    %c0_45 = arith.constant 0 : index
    %73 = vector.load %arg10[%c1_42, %c0_43, %c0_44, %c0_45] : memref<4x2x128x128xf32, #tpu.memory_space<vmem>>, vector<1x1x128x128xf32>
    %74 = vector.shape_cast %73 : vector<1x1x128x128xf32> to vector<128x128xf32>
    %75 = vector.shape_cast %72 : vector<128x128xf32> to vector<1x1x128x128xf32>
    tpu.vector_store %arg10[%c1_42, %c0_43, %c0_44, %c0_45], %75 {strides = array<i32>} : memref<4x2x128x128xf32, #tpu.memory_space<vmem>>, vector<1x1x128x128xf32>,
    %76 = vector.extract_strided_slice %71 {offsets = [0, 128], sizes = [128, 128], strides = [1, 1]} : vector<128x256xf32> to vector<128x128xf32>
    %c1_46 = arith.constant 1 : index
    %c1_47 = arith.constant 1 : index
    %c0_48 = arith.constant 0 : index
    %c0_49 = arith.constant 0 : index
    %77 = vector.load %arg10[%c1_46, %c1_47, %c0_48, %c0_49] : memref<4x2x128x128xf32, #tpu.memory_space<vmem>>, vector<1x1x128x128xf32>
    %78 = vector.shape_cast %77 : vector<1x1x128x128xf32> to vector<128x128xf32>
    %79 = vector.shape_cast %76 : vector<128x128xf32> to vector<1x1x128x128xf32>
    tpu.vector_store %arg10[%c1_46, %c1_47, %c0_48, %c0_49], %79 {strides = array<i32>} : memref<4x2x128x128xf32, #tpu.memory_space<vmem>>, vector<1x1x128x128xf32>,
    %80 = vector.extract_strided_slice %58 {offsets = [32, 0], sizes = [16, 256], strides = [1, 1]} : vector<64x256xf32> to vector<16x256xf32>
    %cst_50 = arith.constant dense<0.000000e+00> : vector<128x256xf32>
    %81 = tpu.matmul %59, %80, %cst_50 {dimension_numbers = #tpu.dot_dimension_numbers<[1], [0], [0], [1], [0, 0, 1, 1], [], []>} : vector<128x16xf32>, vector<16x256xf32>, vector<128x256xf32> -> vector<128x256xf32>
    %82 = vector.extract_strided_slice %81 {offsets = [0, 0], sizes = [128, 128], strides = [1, 1]} : vector<128x256xf32> to vector<128x128xf32>
    %c2 = arith.constant 2 : index
    %c0_51 = arith.constant 0 : index
    %c0_52 = arith.constant 0 : index
    %c0_53 = arith.constant 0 : index
    %83 = vector.load %arg10[%c2, %c0_51, %c0_52, %c0_53] : memref<4x2x128x128xf32, #tpu.memory_space<vmem>>, vector<1x1x128x128xf32>
    %84 = vector.shape_cast %83 : vector<1x1x128x128xf32> to vector<128x128xf32>
    %85 = vector.shape_cast %82 : vector<128x128xf32> to vector<1x1x128x128xf32>
    tpu.vector_store %arg10[%c2, %c0_51, %c0_52, %c0_53], %85 {strides = array<i32>} : memref<4x2x128x128xf32, #tpu.memory_space<vmem>>, vector<1x1x128x128xf32>,
    %86 = vector.extract_strided_slice %81 {offsets = [0, 128], sizes = [128, 128], strides = [1, 1]} : vector<128x256xf32> to vector<128x128xf32>
    %c2_54 = arith.constant 2 : index
    %c1_55 = arith.constant 1 : index
    %c0_56 = arith.constant 0 : index
    %c0_57 = arith.constant 0 : index
    %87 = vector.load %arg10[%c2_54, %c1_55, %c0_56, %c0_57] : memref<4x2x128x128xf32, #tpu.memory_space<vmem>>, vector<1x1x128x128xf32>
    %88 = vector.shape_cast %87 : vector<1x1x128x128xf32> to vector<128x128xf32>
    %89 = vector.shape_cast %86 : vector<128x128xf32> to vector<1x1x128x128xf32>
    tpu.vector_store %arg10[%c2_54, %c1_55, %c0_56, %c0_57], %89 {strides = array<i32>} : memref<4x2x128x128xf32, #tpu.memory_space<vmem>>, vector<1x1x128x128xf32>,
    %90 = vector.extract_strided_slice %58 {offsets = [48, 0], sizes = [16, 256], strides = [1, 1]} : vector<64x256xf32> to vector<16x256xf32>
    %cst_58 = arith.constant dense<0.000000e+00> : vector<128x256xf32>
    %91 = tpu.matmul %59, %90, %cst_58 {dimension_numbers = #tpu.dot_dimension_numbers<[1], [0], [0], [1], [0, 0, 1, 1], [], []>} : vector<128x16xf32>, vector<16x256xf32>, vector<128x256xf32> -> vector<128x256xf32>
    %92 = vector.extract_strided_slice %91 {offsets = [0, 0], sizes = [128, 128], strides = [1, 1]} : vector<128x256xf32> to vector<128x128xf32>
    %c3 = arith.constant 3 : index
    %c0_59 = arith.constant 0 : index
    %c0_60 = arith.constant 0 : index
    %c0_61 = arith.constant 0 : index
    %93 = vector.load %arg10[%c3, %c0_59, %c0_60, %c0_61] : memref<4x2x128x128xf32, #tpu.memory_space<vmem>>, vector<1x1x128x128xf32>
    %94 = vector.shape_cast %93 : vector<1x1x128x128xf32> to vector<128x128xf32>
    %95 = vector.shape_cast %92 : vector<128x128xf32> to vector<1x1x128x128xf32>
    tpu.vector_store %arg10[%c3, %c0_59, %c0_60, %c0_61], %95 {strides = array<i32>} : memref<4x2x128x128xf32, #tpu.memory_space<vmem>>, vector<1x1x128x128xf32>,
    %96 = vector.extract_strided_slice %91 {offsets = [0, 128], sizes = [128, 128], strides = [1, 1]} : vector<128x256xf32> to vector<128x128xf32>
    %c3_62 = arith.constant 3 : index
    %c1_63 = arith.constant 1 : index
    %c0_64 = arith.constant 0 : index
    %c0_65 = arith.constant 0 : index
    %97 = vector.load %arg10[%c3_62, %c1_63, %c0_64, %c0_65] : memref<4x2x128x128xf32, #tpu.memory_space<vmem>>, vector<1x1x128x128xf32>
    %98 = vector.shape_cast %97 : vector<1x1x128x128xf32> to vector<128x128xf32>
    %99 = vector.shape_cast %96 : vector<128x128xf32> to vector<1x1x128x128xf32>
    tpu.vector_store %arg10[%c3_62, %c1_63, %c0_64, %c0_65], %99 {strides = array<i32>} : memref<4x2x128x128xf32, #tpu.memory_space<vmem>>, vector<1x1x128x128xf32>,
    return
  }
  func.func @transform_0(%arg0: i32) -> (i32, i32) {
    %c0_i32 = arith.constant 0 : i32
    %c0_i32_0 = arith.constant 0 : i32
    return %arg0, %c0_i32 : i32, i32
  }
  func.func @transform_1(%arg0: i32) -> (i32, i32) {
    %c0_i32 = arith.constant 0 : i32
    %c0_i32_0 = arith.constant 0 : i32
    %c0_i32_1 = arith.constant 0 : i32
    return %c0_i32, %c0_i32_0 : i32, i32
  }
  func.func @transform_2(%arg0: i32) -> (i32, i32) {
    %c0_i32 = arith.constant 0 : i32
    %c0_i32_0 = arith.constant 0 : i32
    %c0_i32_1 = arith.constant 0 : i32
    return %c0_i32, %c0_i32_0 : i32, i32
  }
  func.func @transform_3(%arg0: i32) -> (i32, i32) {
    %c0_i32 = arith.constant 0 : i32
    %c0_i32_0 = arith.constant 0 : i32
    %c0_i32_1 = arith.constant 0 : i32
    return %c0_i32, %c0_i32_0 : i32, i32
  }
  func.func @transform_4(%arg0: i32) -> (i32, i32) {
    %c0_i32 = arith.constant 0 : i32
    %c0_i32_0 = arith.constant 0 : i32
    %c0_i32_1 = arith.constant 0 : i32
    return %c0_i32, %c0_i32_0 : i32, i32
  }
  func.func @transform_5(%arg0: i32) -> (i32, i32) {
    %c0_i32 = arith.constant 0 : i32
    %c0_i32_0 = arith.constant 0 : i32
    %c0_i32_1 = arith.constant 0 : i32
    return %c0_i32, %c0_i32_0 : i32, i32
  }
  func.func @transform_6(%arg0: i32) -> (i32, i32) {
    %c0_i32 = arith.constant 0 : i32
    %c0_i32_0 = arith.constant 0 : i32
    %c0_i32_1 = arith.constant 0 : i32
    return %c0_i32, %c0_i32_0 : i32, i32
  }
  func.func @transform_7(%arg0: i32) -> (i32, i32) {
    %c0_i32 = arith.constant 0 : i32
    %c0_i32_0 = arith.constant 0 : i32
    %c0_i32_1 = arith.constant 0 : i32
    return %c0_i32, %c0_i32_0 : i32, i32
  }
  func.func @transform_8(%arg0: i32) -> (i32, i32) {
    %c0_i32 = arith.constant 0 : i32
    %c0_i32_0 = arith.constant 0 : i32
    %c0_i32_1 = arith.constant 0 : i32
    return %c0_i32, %c0_i32_0 : i32, i32
  }
  func.func @transform_9(%arg0: i32) -> (i32, i32, i32, i32) {
    %c0_i32 = arith.constant 0 : i32
    %c0_i32_0 = arith.constant 0 : i32
    %c0_i32_1 = arith.constant 0 : i32
    %c0_i32_2 = arith.constant 0 : i32
    return %arg0, %c0_i32, %c0_i32_0, %c0_i32_1 : i32, i32, i32, i32
  }
}

</mosaic_0001>

<llo_original>
// kernel: tpu_custom_call.1
$region0: #{tpu_custom_call.1}
  #allocation0 [shape = 'u32[]', space=smem, size = 0x4, offset = 0x4, fixed_abs, tag = 'smem constant byte address 0x4 - core index']
  #allocation1 [shape = 'u32[72,128]{1,0:T(1,128)}', space=vmem, size = 0x9000, scoped, tag = 'internal scratch']
  #allocation2 [shape = 'f32[64,192]{1,0:T(8,128)}', space=vmem, size = 0x10000, scoped, tag = 'scratch operand']
  %s0 = inlined_call_operand.vmem [shape: f32[128,64], index: 0, kind: input, shape index: {}]
  %s1 = inlined_call_operand.vmem [shape: f32[1,64], index: 1, kind: input, shape index: {}]
  %s2 = inlined_call_operand.vmem [shape: f32[1,64], index: 2, kind: input, shape index: {}]
  %s3 = inlined_call_operand.hbm [shape: f32[192,128], index: 3, kind: input, shape index: {}]
  %s4 = inlined_call_operand.vmem [shape: f32[1,128], index: 4, kind: input, shape index: {}]
  %s5 = inlined_call_operand.vmem [shape: f32[1,128], index: 5, kind: input, shape index: {}]
  %s6 = inlined_call_operand.vmem [shape: f32[128,256], index: 6, kind: input, shape index: {}]
  %s7 = inlined_call_operand.vmem [shape: f32[1,256], index: 7, kind: input, shape index: {}]
  %s8 = inlined_call_operand.vmem [shape: f32[128,16], index: 8, kind: input, shape index: {}]
  %s9 = inlined_call_operand.hbm [shape: f32[8,2,128,128], index: 9, kind: output, shape index: {}]
  %s10 = sld [smem:[#allocation0]]
  $region73: #{tpu_custom_call.1} parent=0
    _
  %s12 = ssub.s32 1, %s10
  %s13 = scalar_select 0, %s12, %s10
  $region1: #{tpu_custom_call.1} parent=0
    #allocation3 [shape = 'u8[98304]{0}', space=vmem, size = 0x18000, scoped, tag = 'input window, operand 3, single buffered']
    #allocation4 [shape = 's32[2]{0}', space=sflag, size = 0x8, scoped, tag = 'scoped memory for tpu_custom_call.1']
    #allocation5 [shape = 's32[2]{0}', space=sflag, size = 0x8, scoped, tag = 'scoped memory for tpu_custom_call.1']
    #allocation6 [shape = 'u8[1048576]{0}', space=vmem, size = 0x100000, scoped, tag = 'output window, operand 0']
    %14 = vsyncpa [#allocation4], 0
    %15 = vsyncpa [#allocation5], 0
    %s16 = scalar_lea.sflag [#allocation5], 1
    %17 = vsyncpa %s16, 0
    loop: start=0, step=1, limit=4
    $region2: #{tpu_custom_call.1} parent=1 // loop_pre_header
      _
    $region3: #{tpu_custom_call.1} parent=1 // loop_header
      %s19 = sphi 0, %s23
      %p20 = scmp.ge.s32.totalorder %s19, 4
      %s29 = sphi 0, %s31
      %s32 = sphi 0, %s29
      %s33 = sphi 0, %s32
      %s49 = sphi 0, %s33
      %s53 = sphi 0, %s53
      %s55 = sphi 0, %s53
      %s56 = sphi 0, %s55
      %s70 = sphi 0, %s56
      %s74 = sphi 0, %s74
      %s76 = sphi 0, %s74
      %s77 = sphi 0, %s76
      %s91 = sphi 0, %s77
      %s95 = sphi 0, %s95
      %s97 = sphi 0, %s95
      %s98 = sphi 0, %s97
      %s112 = sphi 0, %s98
      %s116 = sphi 0, %s116
      %s118 = sphi 0, %s116
      %s119 = sphi 0, %s118
      %s133 = sphi 0, %s119
      %s137 = sphi 0, %s137
      %s139 = sphi 0, %s137
      %s140 = sphi 0, %s139
      %s154 = sphi 0, %s140
      %s158 = sphi 0, %s158
      %s160 = sphi 0, %s158
      %s161 = sphi 0, %s160
      %s175 = sphi 0, %s161
      %s179 = sphi 0, %s179
      %s181 = sphi 0, %s179
      %s182 = sphi 0, %s181
      %s196 = sphi 0, %s182
      %s200 = sphi 0, %s200
      %s202 = sphi 0, %s200
      %s203 = sphi 0, %s202
      %s217 = sphi 0, %s203
      %s223 = sphi 0, %s225
      %s226 = sphi 0, %s223
      %s227 = sphi 0, %s226
      %s243 = sphi 0, %s227
    $region4: #{tpu_custom_call.1} parent=1 // loop_header_branch
      %22 = sbr.rel (%p20) target = $region8
    $region5: #{tpu_custom_call.1} parent=1 // loop_body
      %s24 = ssub.s32 %s19, 1
      %s25 = ssub.s32 %s19, 2
      %s26 = sadd.s32 %s19, 1
      %s27 = ssub.s32 %s19, %s26
      %p28 = scmp.eq.s32.totalorder %s27, 0
      %s30 = sadd.s32 %s29, 1
      %s31 = scalar_select %p28, %s29, %s30
      %p34 = pneg %p28
      %p35 = scmp.eq.s32.totalorder %s19, 1
      %p36 = por %p34, %p35
      %p37 = scmp.ne.s32.totalorder %s29, %s32
      %p38 = scmp.eq.s32.totalorder %s19, 0
      %p39 = por %p37, %p38
      %p40 = scmp.ne.s32.totalorder %s29, %s32
      %p41 = scmp.eq.s32.totalorder %s24, 1
      %p42 = por %p40, %p41
      %p43 = scmp.ne.s32.totalorder %s32, %s33
      %p44 = scmp.eq.s32.totalorder %s24, 0
      %p45 = por %p43, %p44
      %p46 = scmp.ne.s32.totalorder %s32, %s33
      %p47 = scmp.eq.s32.totalorder %s25, 1
      %p48 = por %p46, %p47
      %p50 = scmp.ne.s32.totalorder %s33, %s49
      %p51 = scmp.eq.s32.totalorder %s25, 0
      %p52 = por %p50, %p51
      %s54 = sadd.s32 %s53, 1
      %p57 = scmp.eq.s32.totalorder %s19, 1
      %p58 = scmp.ne.s32.totalorder %s53, %s55
      %p59 = scmp.eq.s32.totalorder %s19, 0
      %p60 = por %p58, %p59
      %p61 = scmp.ne.s32.totalorder %s53, %s55
      %p62 = scmp.eq.s32.totalorder %s24, 1
      %p63 = por %p61, %p62
      %p64 = scmp.ne.s32.totalorder %s55, %s56
      %p65 = scmp.eq.s32.totalorder %s24, 0
      %p66 = por %p64, %p65
      %p67 = scmp.ne.s32.totalorder %s55, %s56
      %p68 = scmp.eq.s32.totalorder %s25, 1
      %p69 = por %p67, %p68
      %p71 = scmp.ne.s32.totalorder %s56, %s70
      %p72 = scmp.eq.s32.totalorder %s25, 0
      %p73 = por %p71, %p72
      %s75 = sadd.s32 %s74, 1
      %p78 = scmp.eq.s32.totalorder %s19, 1
      %p79 = scmp.ne.s32.totalorder %s74, %s76
      %p80 = scmp.eq.s32.totalorder %s19, 0
      %p81 = por %p79, %p80
      %p82 = scmp.ne.s32.totalorder %s74, %s76
      %p83 = scmp.eq.s32.totalorder %s24, 1
      %p84 = por %p82, %p83
      %p85 = scmp.ne.s32.totalorder %s76, %s77
      %p86 = scmp.eq.s32.totalorder %s24, 0
      %p87 = por %p85, %p86
      %p88 = scmp.ne.s32.totalorder %s76, %s77
      %p89 = scmp.eq.s32.totalorder %s25, 1
      %p90 = por %p88, %p89
      %p92 = scmp.ne.s32.totalorder %s77, %s91
      %p93 = scmp.eq.s32.totalorder %s25, 0
      %p94 = por %p92, %p93
      %s96 = sadd.s32 %s95, 1
      %p99 = scmp.eq.s32.totalorder %s19, 1
      %p100 = scmp.ne.s32.totalorder %s95, %s97
      %p101 = scmp.eq.s32.totalorder %s19, 0
      %p102 = por %p100, %p101
      %p103 = scmp.ne.s32.totalorder %s95, %s97
      %p104 = scmp.eq.s32.totalorder %s24, 1
      %p105 = por %p103, %p104
      %p106 = scmp.ne.s32.totalorder %s97, %s98
      %p107 = scmp.eq.s32.totalorder %s24, 0
      %p108 = por %p106, %p107
      %p109 = scmp.ne.s32.totalorder %s97, %s98
      %p110 = scmp.eq.s32.totalorder %s25, 1
      %p111 = por %p109, %p110
      %p113 = scmp.ne.s32.totalorder %s98, %s112
      %p114 = scmp.eq.s32.totalorder %s25, 0
      %p115 = por %p113, %p114
      %s117 = sadd.s32 %s116, 1
      %p120 = scmp.eq.s32.totalorder %s19, 1
      %p121 = scmp.ne.s32.totalorder %s116, %s118
      %p122 = scmp.eq.s32.totalorder %s19, 0
      %p123 = por %p121, %p122
      %p124 = scmp.ne.s32.totalorder %s116, %s118
      %p125 = scmp.eq.s32.totalorder %s24, 1
      %p126 = por %p124, %p125
      %p127 = scmp.ne.s32.totalorder %s118, %s119
      %p128 = scmp.eq.s32.totalorder %s24, 0
      %p129 = por %p127, %p128
      %p130 = scmp.ne.s32.totalorder %s118, %s119
      %p131 = scmp.eq.s32.totalorder %s25, 1
      %p132 = por %p130, %p131
      %p134 = scmp.ne.s32.totalorder %s119, %s133
      %p135 = scmp.eq.s32.totalorder %s25, 0
      %p136 = por %p134, %p135
      %s138 = sadd.s32 %s137, 1
      %p141 = scmp.eq.s32.totalorder %s19, 1
      %p142 = scmp.ne.s32.totalorder %s137, %s139
      %p143 = scmp.eq.s32.totalorder %s19, 0
      %p144 = por %p142, %p143
      %p145 = scmp.ne.s32.totalorder %s137, %s139
      %p146 = scmp.eq.s32.totalorder %s24, 1
      %p147 = por %p145, %p146
      %p148 = scmp.ne.s32.totalorder %s139, %s140
      %p149 = scmp.eq.s32.totalorder %s24, 0
      %p150 = por %p148, %p149
      %p151 = scmp.ne.s32.totalorder %s139, %s140
      %p152 = scmp.eq.s32.totalorder %s25, 1
      %p153 = por %p151, %p152
      %p155 = scmp.ne.s32.totalorder %s140, %s154
      %p156 = scmp.eq.s32.totalorder %s25, 0
      %p157 = por %p155, %p156
      %s159 = sadd.s32 %s158, 1
      %p162 = scmp.eq.s32.totalorder %s19, 1
      %p163 = scmp.ne.s32.totalorder %s158, %s160
      %p164 = scmp.eq.s32.totalorder %s19, 0
      %p165 = por %p163, %p164
      %p166 = scmp.ne.s32.totalorder %s158, %s160
      %p167 = scmp.eq.s32.totalorder %s24, 1
      %p168 = por %p166, %p167
      %p169 = scmp.ne.s32.totalorder %s160, %s161
      %p170 = scmp.eq.s32.totalorder %s24, 0
      %p171 = por %p169, %p170
      %p172 = scmp.ne.s32.totalorder %s160, %s161
      %p173 = scmp.eq.s32.totalorder %s25, 1
      %p174 = por %p172, %p173
      %p176 = scmp.ne.s32.totalorder %s161, %s175
      %p177 = scmp.eq.s32.totalorder %s25, 0
      %p178 = por %p176, %p177
      %s180 = sadd.s32 %s179, 1
      %p183 = scmp.eq.s32.totalorder %s19, 1
      %p184 = scmp.ne.s32.totalorder %s179, %s181
      %p185 = scmp.eq.s32.totalorder %s19, 0
      %p186 = por %p184, %p185
      %p187 = scmp.ne.s32.totalorder %s179, %s181
      %p188 = scmp.eq.s32.totalorder %s24, 1
      %p189 = por %p187, %p188
      %p190 = scmp.ne.s32.totalorder %s181, %s182
      %p191 = scmp.eq.s32.totalorder %s24, 0
      %p192 = por %p190, %p191
      %p193 = scmp.ne.s32.totalorder %s181, %s182
      %p194 = scmp.eq.s32.totalorder %s25, 1
      %p195 = por %p193, %p194
      %p197 = scmp.ne.s32.totalorder %s182, %s196
      %p198 = scmp.eq.s32.totalorder %s25, 0
      %p199 = por %p197, %p198
      %s201 = sadd.s32 %s200, 1
      %p204 = scmp.eq.s32.totalorder %s19, 1
      %p205 = scmp.ne.s32.totalorder %s200, %s202
      %p206 = scmp.eq.s32.totalorder %s19, 0
      %p207 = por %p205, %p206
      %p208 = scmp.ne.s32.totalorder %s200, %s202
      %p209 = scmp.eq.s32.totalorder %s24, 1
      %p210 = por %p208, %p209
      %p211 = scmp.ne.s32.totalorder %s202, %s203
      %p212 = scmp.eq.s32.totalorder %s24, 0
      %p213 = por %p211, %p212
      %p214 = scmp.ne.s32.totalorder %s202, %s203
      %p215 = scmp.eq.s32.totalorder %s25, 1
      %p216 = por %p214, %p215
      %p218 = scmp.ne.s32.totalorder %s203, %s217
      %p219 = scmp.eq.s32.totalorder %s25, 0
      %p220 = por %p218, %p219
      %s221 = ssub.s32 %s19, %s26
      %p222 = scmp.eq.s32.totalorder %s221, 0
      %s224 = sadd.s32 %s223, 1
      %s225 = scalar_select %p222, %s223, %s224
      %p228 = pneg %p222
      %p229 = scmp.eq.s32.totalorder %s19, 1
      %p230 = por %p228, %p229
      %p231 = scmp.ne.s32.totalorder %s223, %s226
      %p232 = scmp.eq.s32.totalorder %s19, 0
      %p233 = por %p231, %p232
      %p234 = scmp.ne.s32.totalorder %s223, %s226
      %p235 = scmp.eq.s32.totalorder %s24, 1
      %p236 = por %p234, %p235
      %p237 = scmp.ne.s32.totalorder %s226, %s227
      %p238 = scmp.eq.s32.totalorder %s24, 0
      %p239 = por %p237, %p238
      %p240 = scmp.ne.s32.totalorder %s226, %s227
      %p241 = scmp.eq.s32.totalorder %s25, 1
      %p242 = por %p240, %p241
      %p244 = scmp.ne.s32.totalorder %s227, %s243
      %p245 = scmp.eq.s32.totalorder %s25, 0
      %p246 = por %p244, %p245
      %p247 = scmp.le.s32.totalorder 1, %s19
      %p248 = scmp.lt.s32.totalorder %s19, 3
      %p249 = pnand %p247, %p248
      %p250 = pneg %p249
      // Predicated region
      $region9: #{tpu_custom_call.1} parent=5 // pred_check
        _
      $region10: #{tpu_custom_call.1} parent=5 // pred_check_branch
        %252 = sbr.rel (%p249) target = $region12
      $region11: #{tpu_custom_call.1} parent=5 // pred_region
        %s253 = ssub.s32 %s19, 1
        // Predicated region
        $region13: #{tpu_custom_call.1} parent=11 // pred_check
          %p254 = pneg %p66
        $region14: #{tpu_custom_call.1} parent=11 // pred_check_branch
          %256 = sbr.rel (%p254) target = $region16
        $region15: #{tpu_custom_call.1} parent=11 // pred_region
          _
        $region16: #{tpu_custom_call.1} parent=11 // pred_fallthru
          _
        // Predicated region
        $region17: #{tpu_custom_call.1} parent=11 // pred_check
          %p257 = pneg %p87
        $region18: #{tpu_custom_call.1} parent=11 // pred_check_branch
          %259 = sbr.rel (%p257) target = $region20
        $region19: #{tpu_custom_call.1} parent=11 // pred_region
          _
        $region20: #{tpu_custom_call.1} parent=11 // pred_fallthru
          _
        // Predicated region
        $region21: #{tpu_custom_call.1} parent=11 // pred_check
          %p260 = pneg %p108
        $region22: #{tpu_custom_call.1} parent=11 // pred_check_branch
          %262 = sbr.rel (%p260) target = $region24
        $region23: #{tpu_custom_call.1} parent=11 // pred_region
          %264 = vsyncadd [#allocation4], 0
          %s265 = sshll.u32 %s3, 4
          %s266 = int_to_ptr.hbm [resolvable:$true] %s265
          %s267 = sshll.u32 [#allocation3], 4
          %s268 = int_to_ptr.vmem [resolvable:$true] %s267
          %273 = dma.hbm_to_vmem [thread:$0]  %s266, 3072, %s268, [#allocation4], 128, 128, 8
        $region24: #{tpu_custom_call.1} parent=11 // pred_fallthru
          _
        // Predicated region
        $region25: #{tpu_custom_call.1} parent=11 // pred_check
          %p274 = pneg %p129
        $region26: #{tpu_custom_call.1} parent=11 // pred_check_branch
          %276 = sbr.rel (%p274) target = $region28
        $region27: #{tpu_custom_call.1} parent=11 // pred_region
          _
        $region28: #{tpu_custom_call.1} parent=11 // pred_fallthru
          _
        // Predicated region
        $region29: #{tpu_custom_call.1} parent=11 // pred_check
          %p277 = pneg %p150
        $region30: #{tpu_custom_call.1} parent=11 // pred_check_branch
          %279 = sbr.rel (%p277) target = $region32
        $region31: #{tpu_custom_call.1} parent=11 // pred_region
          _
        $region32: #{tpu_custom_call.1} parent=11 // pred_fallthru
          _
        // Predicated region
        $region33: #{tpu_custom_call.1} parent=11 // pred_check
          %p280 = pneg %p171
        $region34: #{tpu_custom_call.1} parent=11 // pred_check_branch
          %282 = sbr.rel (%p280) target = $region36
        $region35: #{tpu_custom_call.1} parent=11 // pred_region
          _
        $region36: #{tpu_custom_call.1} parent=11 // pred_fallthru
          _
        // Predicated region
        $region37: #{tpu_custom_call.1} parent=11 // pred_check
          %p283 = pneg %p192
        $region38: #{tpu_custom_call.1} parent=11 // pred_check_branch
          %285 = sbr.rel (%p283) target = $region40
        $region39: #{tpu_custom_call.1} parent=11 // pred_region
          _
        $region40: #{tpu_custom_call.1} parent=11 // pred_fallthru
          _
        // Predicated region
        $region41: #{tpu_custom_call.1} parent=11 // pred_check
          %p286 = pneg %p213
        $region42: #{tpu_custom_call.1} parent=11 // pred_check_branch
          %288 = sbr.rel (%p286) target = $region44
        $region43: #{tpu_custom_call.1} parent=11 // pred_region
          _
        $region44: #{tpu_custom_call.1} parent=11 // pred_fallthru
          _
      $region12: #{tpu_custom_call.1} parent=5 // pred_fallthru
        _
      %p289 = scmp.lt.s32.totalorder %s19, 2
      // Predicated region
      $region45: #{tpu_custom_call.1} parent=5 // pred_check
        %p290 = pneg %p289
      $region46: #{tpu_custom_call.1} parent=5 // pred_check_branch
        %292 = sbr.rel (%p290) target = $region48
      $region47: #{tpu_custom_call.1} parent=5 // pred_region
        // Predicated region
        $region49: #{tpu_custom_call.1} parent=47 // pred_check
          %p293 = pneg %p39
        $region50: #{tpu_custom_call.1} parent=47 // pred_check_branch
          %295 = sbr.rel (%p293) target = $region52
        $region51: #{tpu_custom_call.1} parent=47 // pred_region
          %s296 = smul.u32 8, %s19
          %p297 = scmp.lt.s32.totalorder %s296, 15
          %s298 = scalar_select %p297, %s296, 15
          %s299 = smul.addr %s298, 8
          %s300 = scalar_lea.vmem %s0, %s299
          %s301 = smul.u32 8, %s19
        $region52: #{tpu_custom_call.1} parent=47 // pred_fallthru
          _
      $region48: #{tpu_custom_call.1} parent=5 // pred_fallthru
        _
      %p302 = scmp.le.s32.totalorder 1, %s19
      %p303 = scmp.lt.s32.totalorder %s19, 3
      %p304 = pnand %p302, %p303
      %p305 = pneg %p304
      // Predicated region
      $region53: #{tpu_custom_call.1} parent=5 // pred_check
        _
      $region54: #{tpu_custom_call.1} parent=5 // pred_check_branch
        %307 = sbr.rel (%p304) target = $region56
      $region55: #{tpu_custom_call.1} parent=5 // pred_region
        %s308 = ssub.s32 %s19, 1
        // Predicated region
        $region57: #{tpu_custom_call.1} parent=55 // pred_check
          %p309 = pneg %p108
        $region58: #{tpu_custom_call.1} parent=55 // pred_check_branch
          %311 = sbr.rel (%p309) target = $region60
        $region59: #{tpu_custom_call.1} parent=55 // pred_region
          %313 = dma.done [#allocation4], 3072
        $region60: #{tpu_custom_call.1} parent=55 // pred_fallthru
          _
        %s314 = smul.u32 8, %s24
        %p315 = scmp.lt.s32.totalorder %s314, 15
        %s316 = scalar_select %p315, %s314, 15
        %s317 = smul.addr %s316, 8
        %s318 = scalar_lea.vmem %s0, %s317
        %p319 = pneg %p45
        %p320 = pneg %p42
        %p321 = pneg %p66
        %p322 = pneg %p63
        %p323 = pneg %p87
        %p324 = pneg %p84
        %p325 = pneg %p108
        %p326 = pneg %p105
        %p327 = pneg %p129
        %p328 = pneg %p126
        %p329 = pneg %p150
        %p330 = pneg %p147
        %p331 = pneg %p171
        %p332 = pneg %p168
        %p333 = pneg %p192
        %p334 = pneg %p189
        %p335 = pneg %p213
        %p336 = pneg %p210
        %p337 = pneg %p239
        %p338 = pneg %p236
        %s339 = sand.u32 %s226, 1
        %s340 = scalar_lea.sflag [#allocation5], %s339
        %s341 = sand.u32 %s226, 1
        %s342 = smul.addr %s341, 1024
        %s343 = scalar_lea.vmem [#allocation6], %s342
        %s344 = smul.u32 8, %s24
        %p345 = scmp.lt.s32.totalorder %s344, 15
        %s346 = scalar_select %p345, %s344, 15
        %s347 = smul.addr %s346, 8
        %s348 = scalar_lea.vmem %s0, %s347
        %s349 = smul.u32 8, %s24
        %s350 = smul.u32 4, %s24
        %v351 = vld [vmem:[%s348] sm:$0xff]
        %v352 = vld [vmem:[%s348 + $0x8] sm:$0xff]
        %v353 = vld [vmem:[%s348 + $0x10] sm:$0xff]
        %v354 = vld [vmem:[%s348 + $0x18] sm:$0xff]
        %v355 = vld [vmem:[%s348 + $0x20] sm:$0xff]
        %v356 = vld [vmem:[%s348 + $0x28] sm:$0xff]
        %v357 = vld [vmem:[%s348 + $0x30] sm:$0xff]
        %v358 = vld [vmem:[%s348 + $0x38] sm:$0xff]
        %v359 = vld [vmem:[%s1] sm:$0x1]
        %v361 = vperm.slane %v359, 0
        %v363 = vmul.f32 %v351, %v361
        %v364 = vmul.f32 %v352, %v361
        %v365 = vmul.f32 %v353, %v361
        %v366 = vmul.f32 %v354, %v361
        %v367 = vmul.f32 %v355, %v361
        %v368 = vmul.f32 %v356, %v361
        %v369 = vmul.f32 %v357, %v361
        %v370 = vmul.f32 %v358, %v361
        %v371 = vld [vmem:[%s2] sm:$0x1]
        %v373 = vperm.slane %v371, 0
        %v375 = vadd.f32 %v363, %v373
        %v376 = vadd.f32 %v364, %v373
        %v377 = vadd.f32 %v365, %v373
        %v378 = vadd.f32 %v366, %v373
        %v379 = vadd.f32 %v367, %v373
        %v380 = vadd.f32 %v368, %v373
        %v381 = vadd.f32 %v369, %v373
        %v382 = vadd.f32 %v370, %v373
        %v383 = vmax.f32 %v375, 0.0
        %v384 = vmax.f32 %v376, 0.0
        %v385 = vmax.f32 %v377, 0.0
        %v386 = vmax.f32 %v378, 0.0
        %v387 = vmax.f32 %v379, 0.0
        %v388 = vmax.f32 %v380, 0.0
        %v389 = vmax.f32 %v381, 0.0
        %v390 = vmax.f32 %v382, 0.0
        %v391 = vlaneseq
        %v392 = vshrl.u32 %v391, 7
        %v393 = vadd.s32 %v392, 8
        %v394 = vadd.s32 %v392, 16
        %v395 = vadd.s32 %v392, 24
        %v396 = vadd.s32 %v392, 32
        %v397 = vadd.s32 %v392, 40
        %v398 = vadd.s32 %v392, 48
        %v399 = vadd.s32 %v392, 56
        %vm400 = vcmp.lt.s32.totalorder %v392, 0
        %v401 = vsub.s32 0, %v392
        %v402 = vsel %vm400, %v401, %v392
        %v403 = vshrl.u32 %v402, 4
        %v404 = vand.u32 %v402, 15
        %v405 = vsub.s32 0, %v404
        %v406 = vsel %vm400, %v405, %v404
        %vm407 = vcmp.lt.s32.totalorder %v393, 0
        %v408 = vsub.s32 0, %v393
        %v409 = vsel %vm407, %v408, %v393
        %v410 = vshrl.u32 %v409, 4
        %v411 = vand.u32 %v409, 15
        %v412 = vsub.s32 0, %v411
        %v413 = vsel %vm407, %v412, %v411
        %vm414 = vcmp.lt.s32.totalorder %v394, 0
        %v415 = vsub.s32 0, %v394
        %v416 = vsel %vm414, %v415, %v394
        %v417 = vshrl.u32 %v416, 4
        %v418 = vand.u32 %v416, 15
        %v419 = vsub.s32 0, %v418
        %v420 = vsel %vm414, %v419, %v418
        %vm421 = vcmp.lt.s32.totalorder %v395, 0
        %v422 = vsub.s32 0, %v395
        %v423 = vsel %vm421, %v422, %v395
        %v424 = vshrl.u32 %v423, 4
        %v425 = vand.u32 %v423, 15
        %v426 = vsub.s32 0, %v425
        %v427 = vsel %vm421, %v426, %v425
        %vm428 = vcmp.lt.s32.totalorder %v396, 0
        %v429 = vsub.s32 0, %v396
        %v430 = vsel %vm428, %v429, %v396
        %v431 = vshrl.u32 %v430, 4
        %v432 = vand.u32 %v430, 15
        %v433 = vsub.s32 0, %v432
        %v434 = vsel %vm428, %v433, %v432
        %vm435 = vcmp.lt.s32.totalorder %v397, 0
        %v436 = vsub.s32 0, %v397
        %v437 = vsel %vm435, %v436, %v397
        %v438 = vshrl.u32 %v437, 4
        %v439 = vand.u32 %v437, 15
        %v440 = vsub.s32 0, %v439
        %v441 = vsel %vm435, %v440, %v439
        %vm442 = vcmp.lt.s32.totalorder %v398, 0
        %v443 = vsub.s32 0, %v398
        %v444 = vsel %vm442, %v443, %v398
        %v445 = vshrl.u32 %v444, 4
        %v446 = vand.u32 %v444, 15
        %v447 = vsub.s32 0, %v446
        %v448 = vsel %vm442, %v447, %v446
        %vm449 = vcmp.lt.s32.totalorder %v399, 0
        %v450 = vsub.s32 0, %v399
        %v451 = vsel %vm449, %v450, %v399
        %v452 = vshrl.u32 %v451, 4
        %v453 = vand.u32 %v451, 15
        %v454 = vsub.s32 0, %v453
        %v455 = vsel %vm449, %v454, %v453
        %vm456 = vcmp.ne.s32.totalorder %v406, 0
        %vm457 = vcmp.ne.s32.totalorder %v413, 0
        %vm458 = vcmp.ne.s32.totalorder %v420, 0
        %vm459 = vcmp.ne.s32.totalorder %v427, 0
        %vm460 = vcmp.ne.s32.totalorder %v434, 0
        %vm461 = vcmp.ne.s32.totalorder %v441, 0
        %vm462 = vcmp.ne.s32.totalorder %v448, 0
        %vm463 = vcmp.ne.s32.totalorder %v455, 0
        %vm464 = vcmp.lt.s32.totalorder %v406, 0
        %vm465 = vcmp.lt.s32.totalorder %v413, 0
        %vm466 = vcmp.lt.s32.totalorder %v420, 0
        %vm467 = vcmp.lt.s32.totalorder %v427, 0
        %vm468 = vcmp.lt.s32.totalorder %v434, 0
        %vm469 = vcmp.lt.s32.totalorder %v441, 0
        %vm470 = vcmp.lt.s32.totalorder %v448, 0
        %vm471 = vcmp.lt.s32.totalorder %v455, 0
        %vm472 = vmand %vm464, %vm456
        %vm473 = vmand %vm465, %vm457
        %vm474 = vmand %vm466, %vm458
        %vm475 = vmand %vm467, %vm459
        %vm476 = vmand %vm468, %vm460
        %vm477 = vmand %vm469, %vm461
        %vm478 = vmand %vm470, %vm462
        %vm479 = vmand %vm471, %vm463
        %v480 = vadd.s32 %v406, 16
        %v481 = vadd.s32 %v413, 16
        %v482 = vadd.s32 %v420, 16
        %v483 = vadd.s32 %v427, 16
        %v484 = vadd.s32 %v434, 16
        %v485 = vadd.s32 %v441, 16
        %v486 = vadd.s32 %v448, 16
        %v487 = vadd.s32 %v455, 16
        %v488 = vsel %vm472, %v480, %v406
        %v489 = vsel %vm473, %v481, %v413
        %v490 = vsel %vm474, %v482, %v420
        %v491 = vsel %vm475, %v483, %v427
        %v492 = vsel %vm476, %v484, %v434
        %v493 = vsel %vm477, %v485, %v441
        %v494 = vsel %vm478, %v486, %v448
        %v495 = vsel %vm479, %v487, %v455
        %vm496 = vcmp.gt.s32.totalorder %v488, 0
        %vm497 = vcmp.gt.s32.totalorder %v489, 0
        %vm498 = vcmp.gt.s32.totalorder %v490, 0
        %vm499 = vcmp.gt.s32.totalorder %v491, 0
        %vm500 = vcmp.gt.s32.totalorder %v492, 0
        %vm501 = vcmp.gt.s32.totalorder %v493, 0
        %vm502 = vcmp.gt.s32.totalorder %v494, 0
        %vm503 = vcmp.gt.s32.totalorder %v495, 0
        %v504 = vrot.slane %v383, 7
        %v505 = vrot.slane %v384, 7
        %v506 = vrot.slane %v385, 7
        %v507 = vrot.slane %v386, 7
        %v508 = vrot.slane %v387, 7
        %v509 = vrot.slane %v388, 7
        %v510 = vrot.slane %v389, 7
        %v511 = vrot.slane %v390, 7
        %vm512 = vcmp.lt.s32.totalorder %v392, 1
        %v513 = vsel %vm512, %v510, %v511
        %v514 = vsel %vm512, %v509, %v510
        %v515 = vsel %vm512, %v508, %v509
        %v516 = vsel %vm512, %v507, %v508
        %v517 = vsel %vm512, %v506, %v507
        %v518 = vsel %vm512, %v505, %v506
        %v519 = vsel %vm512, %v504, %v505
        %v520 = vsel %vm512, %v511, %v504
        %v521 = vsel %vm496, 1, 0
        %v522 = vsel %vm497, 1, 0
        %v523 = vsel %vm498, 1, 0
        %v524 = vsel %vm499, 1, 0
        %v525 = vsel %vm500, 1, 0
        %v526 = vsel %vm501, 1, 0
        %v527 = vsel %vm502, 1, 0
        %v528 = vsel %vm503, 1, 0
        %vm529 = vcmp.eq.s32.totalorder %v521, 1
        %vm530 = vcmp.eq.s32.totalorder %v522, 1
        %vm531 = vcmp.eq.s32.totalorder %v523, 1
        %vm532 = vcmp.eq.s32.totalorder %v524, 1
        %vm533 = vcmp.eq.s32.totalorder %v525, 1
        %vm534 = vcmp.eq.s32.totalorder %v526, 1
        %vm535 = vcmp.eq.s32.totalorder %v527, 1
        %vm536 = vcmp.eq.s32.totalorder %v528, 1
        %v537 = vsel %vm529, %v520, 0.0
        %v538 = vsel %vm530, %v519, 0.0
        %v539 = vsel %vm531, %v518, 0.0
        %v540 = vsel %vm532, %v517, 0.0
        %v541 = vsel %vm533, %v516, 0.0
        %v542 = vsel %vm534, %v515, 0.0
        %v543 = vsel %vm535, %v514, 0.0
        %v544 = vsel %vm536, %v513, 0.0
        %vm545 = vcmp.lt.s32.totalorder %v488, 15
        %vm546 = vcmp.lt.s32.totalorder %v489, 15
        %vm547 = vcmp.lt.s32.totalorder %v490, 15
        %vm548 = vcmp.lt.s32.totalorder %v491, 15
        %vm549 = vcmp.lt.s32.totalorder %v492, 15
        %vm550 = vcmp.lt.s32.totalorder %v493, 15
        %vm551 = vcmp.lt.s32.totalorder %v494, 15
        %vm552 = vcmp.lt.s32.totalorder %v495, 15
        %v553 = vrot.slane %v383, 1
        %v554 = vrot.slane %v384, 1
        %v555 = vrot.slane %v385, 1
        %v556 = vrot.slane %v386, 1
        %v557 = vrot.slane %v387, 1
        %v558 = vrot.slane %v388, 1
        %v559 = vrot.slane %v389, 1
        %v560 = vrot.slane %v390, 1
        %vm561 = vcmp.lt.s32.totalorder %v392, 7
        %v562 = vsel %vm561, %v559, %v560
        %v563 = vsel %vm561, %v558, %v559
        %v564 = vsel %vm561, %v557, %v558
        %v565 = vsel %vm561, %v556, %v557
        %v566 = vsel %vm561, %v555, %v556
        %v567 = vsel %vm561, %v554, %v555
        %v568 = vsel %vm561, %v553, %v554
        %v569 = vsel %vm561, %v560, %v553
        %v570 = vsel %vm545, 1, 0
        %v571 = vsel %vm546, 1, 0
        %v572 = vsel %vm547, 1, 0
        %v573 = vsel %vm548, 1, 0
        %v574 = vsel %vm549, 1, 0
        %v575 = vsel %vm550, 1, 0
        %v576 = vsel %vm551, 1, 0
        %v577 = vsel %vm552, 1, 0
        %vm578 = vcmp.eq.s32.totalorder %v570, 1
        %vm579 = vcmp.eq.s32.totalorder %v571, 1
        %vm580 = vcmp.eq.s32.totalorder %v572, 1
        %vm581 = vcmp.eq.s32.totalorder %v573, 1
        %vm582 = vcmp.eq.s32.totalorder %v574, 1
        %vm583 = vcmp.eq.s32.totalorder %v575, 1
        %vm584 = vcmp.eq.s32.totalorder %v576, 1
        %vm585 = vcmp.eq.s32.totalorder %v577, 1
        %v586 = vsel %vm578, %v568, 0.0
        %v587 = vsel %vm579, %v567, 0.0
        %v588 = vsel %vm580, %v566, 0.0
        %v589 = vsel %vm581, %v565, 0.0
        %v590 = vsel %vm582, %v564, 0.0
        %v591 = vsel %vm583, %v563, 0.0
        %v592 = vsel %vm584, %v562, 0.0
        %v593 = vsel %vm585, %v569, 0.0
        %vm594 = vcmask 523264
        %595 = vst.msk [vmem:[#allocation2] sm:$0xff] %vm594, %v537
        %596 = vst.msk [vmem:[#allocation2 + $0x10] sm:$0xff] %vm594, %v538
        %597 = vst.msk [vmem:[#allocation2 + $0x20] sm:$0xff] %vm594, %v539
        %598 = vst.msk [vmem:[#allocation2 + $0x30] sm:$0xff] %vm594, %v540
        %599 = vst.msk [vmem:[#allocation2 + $0x40] sm:$0xff] %vm594, %v541
        %600 = vst.msk [vmem:[#allocation2 + $0x50] sm:$0xff] %vm594, %v542
        %601 = vst.msk [vmem:[#allocation2 + $0x60] sm:$0xff] %vm594, %v543
        %602 = vst.msk [vmem:[#allocation2 + $0x70] sm:$0xff] %vm594, %v544
        %611 = vrot.lane.b32.xlu0 %v383, 64
        %v612 = vpop.permute.xlu0 %611
        %613 = vrot.lane.b32.xlu0 %v384, 64
        %v614 = vpop.permute.xlu0 %613
        %615 = vrot.lane.b32.xlu0 %v385, 64
        %v616 = vpop.permute.xlu0 %615
        %617 = vrot.lane.b32.xlu0 %v386, 64
        %v618 = vpop.permute.xlu0 %617
        %619 = vrot.lane.b32.xlu0 %v387, 64
        %v620 = vpop.permute.xlu0 %619
        %621 = vrot.lane.b32.xlu0 %v388, 64
        %v622 = vpop.permute.xlu0 %621
        %623 = vrot.lane.b32.xlu0 %v389, 64
        %v624 = vpop.permute.xlu0 %623
        %625 = vrot.lane.b32.xlu0 %v390, 64
        %v626 = vpop.permute.xlu0 %625
        %vm635 = vcmask 1048064
        %636 = vst.msk [vmem:[#allocation2] sm:$0xff] %vm635, %v612
        %637 = vst.msk [vmem:[#allocation2 + $0x10] sm:$0xff] %vm635, %v614
        %638 = vst.msk [vmem:[#allocation2 + $0x20] sm:$0xff] %vm635, %v616
        %639 = vst.msk [vmem:[#allocation2 + $0x30] sm:$0xff] %vm635, %v618
        %640 = vst.msk [vmem:[#allocation2 + $0x40] sm:$0xff] %vm635, %v620
        %641 = vst.msk [vmem:[#allocation2 + $0x50] sm:$0xff] %vm635, %v622
        %642 = vst.msk [vmem:[#allocation2 + $0x60] sm:$0xff] %vm635, %v624
        %643 = vst.msk [vmem:[#allocation2 + $0x70] sm:$0xff] %vm635, %v626
        %644 = vst.msk [vmem:[#allocation2 + $0x8] sm:$0xff] %vm594, %v586
        %645 = vst.msk [vmem:[#allocation2 + $0x18] sm:$0xff] %vm594, %v587
        %646 = vst.msk [vmem:[#allocation2 + $0x28] sm:$0xff] %vm594, %v588
        %647 = vst.msk [vmem:[#allocation2 + $0x38] sm:$0xff] %vm594, %v589
        %648 = vst.msk [vmem:[#allocation2 + $0x48] sm:$0xff] %vm594, %v590
        %649 = vst.msk [vmem:[#allocation2 + $0x58] sm:$0xff] %vm594, %v591
        %650 = vst.msk [vmem:[#allocation2 + $0x68] sm:$0xff] %vm594, %v592
        %651 = vst.msk [vmem:[#allocation2 + $0x78] sm:$0xff] %vm594, %v593
        %v652 = vld [vmem:[#allocation2] sm:$0xff]
        %v653 = vld [vmem:[#allocation2 + $0x8] sm:$0xff]
        %v654 = vld [vmem:[#allocation2 + $0x10] sm:$0xff]
        %v655 = vld [vmem:[#allocation2 + $0x18] sm:$0xff]
        %v656 = vld [vmem:[#allocation2 + $0x20] sm:$0xff]
        %v657 = vld [vmem:[#allocation2 + $0x28] sm:$0xff]
        %v658 = vld [vmem:[#allocation2 + $0x30] sm:$0xff]
        %v659 = vld [vmem:[#allocation2 + $0x38] sm:$0xff]
        %v660 = vld [vmem:[#allocation2 + $0x40] sm:$0xff]
        %v661 = vld [vmem:[#allocation2 + $0x48] sm:$0xff]
        %v662 = vld [vmem:[#allocation2 + $0x50] sm:$0xff]
        %v663 = vld [vmem:[#allocation2 + $0x58] sm:$0xff]
        %v664 = vld [vmem:[#allocation2 + $0x60] sm:$0xff]
        %v665 = vld [vmem:[#allocation2 + $0x68] sm:$0xff]
        %v666 = vld [vmem:[#allocation2 + $0x70] sm:$0xff]
        %v667 = vld [vmem:[#allocation2 + $0x78] sm:$0xff]
        %v668 = vld [vmem:[#allocation3] sm:$0xff]
        %v669 = vld [vmem:[#allocation3 + $0x8] sm:$0xff]
        %v670 = vld [vmem:[#allocation3 + $0x10] sm:$0xff]
        %v671 = vld [vmem:[#allocation3 + $0x18] sm:$0xff]
        %v672 = vld [vmem:[#allocation3 + $0x20] sm:$0xff]
        %v673 = vld [vmem:[#allocation3 + $0x28] sm:$0xff]
        %v674 = vld [vmem:[#allocation3 + $0x30] sm:$0xff]
        %v675 = vld [vmem:[#allocation3 + $0x38] sm:$0xff]
        %v676 = vld [vmem:[#allocation3 + $0x40] sm:$0xff]
        %v677 = vld [vmem:[#allocation3 + $0x48] sm:$0xff]
        %v678 = vld [vmem:[#allocation3 + $0x50] sm:$0xff]
        %v679 = vld [vmem:[#allocation3 + $0x58] sm:$0xff]
        %v680 = vld [vmem:[#allocation3 + $0x60] sm:$0xff]
        %v681 = vld [vmem:[#allocation3 + $0x68] sm:$0xff]
        %v682 = vld [vmem:[#allocation3 + $0x70] sm:$0xff]
        %v683 = vld [vmem:[#allocation3 + $0x78] sm:$0xff]
        %v684 = vld [vmem:[#allocation3 + $0x80] sm:$0xff]
        %v685 = vld [vmem:[#allocation3 + $0x88] sm:$0xff]
        %v686 = vld [vmem:[#allocation3 + $0x90] sm:$0xff]
        %v687 = vld [vmem:[#allocation3 + $0x98] sm:$0xff]
        %v688 = vld [vmem:[#allocation3 + $0xa0] sm:$0xff]
        %v689 = vld [vmem:[#allocation3 + $0xa8] sm:$0xff]
        %v690 = vld [vmem:[#allocation3 + $0xb0] sm:$0xff]
        %v691 = vld [vmem:[#allocation3 + $0xb8] sm:$0xff]
        %v693 = vsel %vm594, %v653, 0
        %v696 = vsel %vm594, %v655, 0
        %v699 = vsel %vm594, %v657, 0
        %v702 = vsel %vm594, %v659, 0
        %v705 = vsel %vm594, %v661, 0
        %v708 = vsel %vm594, %v663, 0
        %v711 = vsel %vm594, %v665, 0
        %v714 = vsel %vm594, %v667, 0
        %716 = vmatpush.msra.mxu0 %v683
        %717 = vmatpush.msra.mxu0 %v682
        %718 = vmatpush.msra.mxu0 %v681
        %719 = vmatpush.msra.mxu0 %v680
        %720 = vmatpush.msra.mxu0 %v679
        %721 = vmatpush.msra.mxu0 %v678
        %722 = vmatpush.msra.mxu0 %v677
        %723 = vmatpush.msra.mxu0 %v676
        %724 = vmatpush.msra.mxu0 %v675
        %725 = vmatpush.msra.mxu0 %v674
        %726 = vmatpush.msra.mxu0 %v673
        %727 = vmatpush.msra.mxu0 %v672
        %728 = vmatpush.msra.mxu0 %v671
        %729 = vmatpush.msra.mxu0 %v670
        %730 = vmatpush.msra.mxu0 %v669
        %731 = vmatpush.msra.mxu0 %v668
        %732 = vmatmul.f32.gmra.mxu0 %v652
        %v733 = vpop.f32.mrf.mxu0
        %v734 = vadd.f32 0.0, %v733
        %735 = vmatmul.f32.gmra.mxu0 %v654
        %v736 = vpop.f32.mrf.mxu0
        %v737 = vadd.f32 0.0, %v736
        %738 = vmatmul.f32.gmra.mxu0 %v656
        %v739 = vpop.f32.mrf.mxu0
        %v740 = vadd.f32 0.0, %v739
        %741 = vmatmul.f32.gmra.mxu0 %v658
        %v742 = vpop.f32.mrf.mxu0
        %v743 = vadd.f32 0.0, %v742
        %744 = vmatmul.f32.gmra.mxu0 %v660
        %v745 = vpop.f32.mrf.mxu0
        %v746 = vadd.f32 0.0, %v745
        %747 = vmatmul.f32.gmra.mxu0 %v662
        %v748 = vpop.f32.mrf.mxu0
        %v749 = vadd.f32 0.0, %v748
        %750 = vmatmul.f32.gmra.mxu0 %v664
        %v751 = vpop.f32.mrf.mxu0
        %v752 = vadd.f32 0.0, %v751
        %753 = vmatmul.f32.gmra.mxu0 %v666
        %v754 = vpop.f32.mrf.mxu0
        %v755 = vadd.f32 0.0, %v754
        %756 = vdwg.mxu0
        %757 = vmatpush.msra.mxu0 0.0
        %758 = vmatpush.msra.mxu0 0.0
        %759 = vmatpush.msra.mxu0 0.0
        %760 = vmatpush.msra.mxu0 0.0
        %761 = vmatpush.msra.mxu0 0.0
        %762 = vmatpush.msra.mxu0 0.0
        %763 = vmatpush.msra.mxu0 0.0
        %764 = vmatpush.msra.mxu0 0.0
        %765 = vmatpush.msra.mxu0 %v691
        %766 = vmatpush.msra.mxu0 %v690
        %767 = vmatpush.msra.mxu0 %v689
        %768 = vmatpush.msra.mxu0 %v688
        %769 = vmatpush.msra.mxu0 %v687
        %770 = vmatpush.msra.mxu0 %v686
        %771 = vmatpush.msra.mxu0 %v685
        %772 = vmatpush.msra.mxu0 %v684
        %773 = vmatmul.f32.gmra.mxu0 %v693
        %v774 = vpop.f32.mrf.mxu0
        %v775 = vadd.f32 %v734, %v774
        %776 = vmatmul.f32.gmra.mxu0 %v696
        %v777 = vpop.f32.mrf.mxu0
        %v778 = vadd.f32 %v737, %v777
        %779 = vmatmul.f32.gmra.mxu0 %v699
        %v780 = vpop.f32.mrf.mxu0
        %v781 = vadd.f32 %v740, %v780
        %782 = vmatmul.f32.gmra.mxu0 %v702
        %v783 = vpop.f32.mrf.mxu0
        %v784 = vadd.f32 %v743, %v783
        %785 = vmatmul.f32.gmra.mxu0 %v705
        %v786 = vpop.f32.mrf.mxu0
        %v787 = vadd.f32 %v746, %v786
        %788 = vmatmul.f32.gmra.mxu0 %v708
        %v789 = vpop.f32.mrf.mxu0
        %v790 = vadd.f32 %v749, %v789
        %791 = vmatmul.f32.gmra.mxu0 %v711
        %v792 = vpop.f32.mrf.mxu0
        %v793 = vadd.f32 %v752, %v792
        %794 = vmatmul.f32.gmra.mxu0 %v714
        %v795 = vpop.f32.mrf.mxu0
        %v796 = vadd.f32 %v755, %v795
        %797 = vdwg.mxu0
        %v798 = vld [vmem:[%s4] sm:$0x1]
        %v800 = vperm.slane %v798, 0
        %v802 = vmul.f32 %v775, %v800
        %v803 = vmul.f32 %v778, %v800
        %v804 = vmul.f32 %v781, %v800
        %v805 = vmul.f32 %v784, %v800
        %v806 = vmul.f32 %v787, %v800
        %v807 = vmul.f32 %v790, %v800
        %v808 = vmul.f32 %v793, %v800
        %v809 = vmul.f32 %v796, %v800
        %v810 = vld [vmem:[%s5] sm:$0x1]
        %v812 = vperm.slane %v810, 0
        %v814 = vadd.f32 %v802, %v812
        %v815 = vadd.f32 %v803, %v812
        %v816 = vadd.f32 %v804, %v812
        %v817 = vadd.f32 %v805, %v812
        %v818 = vadd.f32 %v806, %v812
        %v819 = vadd.f32 %v807, %v812
        %v820 = vadd.f32 %v808, %v812
        %v821 = vadd.f32 %v809, %v812
        %v822 = vmax.f32 %v814, 0.0
        %v823 = vmax.f32 %v815, 0.0
        %v824 = vmax.f32 %v816, 0.0
        %v825 = vmax.f32 %v817, 0.0
        %v826 = vmax.f32 %v818, 0.0
        %v827 = vmax.f32 %v819, 0.0
        %v828 = vmax.f32 %v820, 0.0
        %v829 = vmax.f32 %v821, 0.0
        %v830 = vld [vmem:[%s6] sm:$0xff]
        %v831 = vld [vmem:[%s6 + $0x8] sm:$0xff]
        %v832 = vld [vmem:[%s6 + $0x10] sm:$0xff]
        %v833 = vld [vmem:[%s6 + $0x18] sm:$0xff]
        %v834 = vld [vmem:[%s6 + $0x20] sm:$0xff]
        %v835 = vld [vmem:[%s6 + $0x28] sm:$0xff]
        %v836 = vld [vmem:[%s6 + $0x30] sm:$0xff]
        %v837 = vld [vmem:[%s6 + $0x38] sm:$0xff]
        %v838 = vld [vmem:[%s6 + $0x40] sm:$0xff]
        %v839 = vld [vmem:[%s6 + $0x48] sm:$0xff]
        %v840 = vld [vmem:[%s6 + $0x50] sm:$0xff]
        %v841 = vld [vmem:[%s6 + $0x58] sm:$0xff]
        %v842 = vld [vmem:[%s6 + $0x60] sm:$0xff]
        %v843 = vld [vmem:[%s6 + $0x68] sm:$0xff]
        %v844 = vld [vmem:[%s6 + $0x70] sm:$0xff]
        %v845 = vld [vmem:[%s6 + $0x78] sm:$0xff]
        %v846 = vld [vmem:[%s6 + $0x80] sm:$0xff]
        %v847 = vld [vmem:[%s6 + $0x88] sm:$0xff]
        %v848 = vld [vmem:[%s6 + $0x90] sm:$0xff]
        %v849 = vld [vmem:[%s6 + $0x98] sm:$0xff]
        %v850 = vld [vmem:[%s6 + $0xa0] sm:$0xff]
        %v851 = vld [vmem:[%s6 + $0xa8] sm:$0xff]
        %v852 = vld [vmem:[%s6 + $0xb0] sm:$0xff]
        %v853 = vld [vmem:[%s6 + $0xb8] sm:$0xff]
        %v854 = vld [vmem:[%s6 + $0xc0] sm:$0xff]
        %v855 = vld [vmem:[%s6 + $0xc8] sm:$0xff]
        %v856 = vld [vmem:[%s6 + $0xd0] sm:$0xff]
        %v857 = vld [vmem:[%s6 + $0xd8] sm:$0xff]
        %v858 = vld [vmem:[%s6 + $0xe0] sm:$0xff]
        %v859 = vld [vmem:[%s6 + $0xe8] sm:$0xff]
        %v860 = vld [vmem:[%s6 + $0xf0] sm:$0xff]
        %v861 = vld [vmem:[%s6 + $0xf8] sm:$0xff]
        %v862 = vld [vmem:[%s7] sm:$0x3]
        %v864 = vperm.slane %v862, 0
        %v865 = vperm.slane %v862, 1
        %868 = vmatpush.msra.mxu0 %v860
        %869 = vmatpush.msra.mxu0 %v858
        %870 = vmatpush.msra.mxu0 %v856
        %871 = vmatpush.msra.mxu0 %v854
        %872 = vmatpush.msra.mxu0 %v852
        %873 = vmatpush.msra.mxu0 %v850
        %874 = vmatpush.msra.mxu0 %v848
        %875 = vmatpush.msra.mxu0 %v846
        %876 = vmatpush.msra.mxu0 %v844
        %877 = vmatpush.msra.mxu0 %v842
        %878 = vmatpush.msra.mxu0 %v840
        %879 = vmatpush.msra.mxu0 %v838
        %880 = vmatpush.msra.mxu0 %v836
        %881 = vmatpush.msra.mxu0 %v834
        %882 = vmatpush.msra.mxu0 %v832
        %883 = vmatpush.msra.mxu0 %v830
        %884 = vmatmul.f32.gmra.mxu0 %v822
        %v885 = vpop.f32.mrf.mxu0
        %v886 = vadd.f32 %v864, %v885
        %887 = vmatmul.f32.gmra.mxu0 %v823
        %v888 = vpop.f32.mrf.mxu0
        %v889 = vadd.f32 %v864, %v888
        %890 = vmatmul.f32.gmra.mxu0 %v824
        %v891 = vpop.f32.mrf.mxu0
        %v892 = vadd.f32 %v864, %v891
        %893 = vmatmul.f32.gmra.mxu0 %v825
        %v894 = vpop.f32.mrf.mxu0
        %v895 = vadd.f32 %v864, %v894
        %896 = vmatmul.f32.gmra.mxu0 %v826
        %v897 = vpop.f32.mrf.mxu0
        %v898 = vadd.f32 %v864, %v897
        %899 = vmatmul.f32.gmra.mxu0 %v827
        %v900 = vpop.f32.mrf.mxu0
        %v901 = vadd.f32 %v864, %v900
        %902 = vmatmul.f32.gmra.mxu0 %v828
        %v903 = vpop.f32.mrf.mxu0
        %v904 = vadd.f32 %v864, %v903
        %905 = vmatmul.f32.gmra.mxu0 %v829
        %v906 = vpop.f32.mrf.mxu0
        %v907 = vadd.f32 %v864, %v906
        %908 = vdwg.mxu0
        %909 = vmatpush.msra.mxu0 %v861
        %910 = vmatpush.msra.mxu0 %v859
        %911 = vmatpush.msra.mxu0 %v857
        %912 = vmatpush.msra.mxu0 %v855
        %913 = vmatpush.msra.mxu0 %v853
        %914 = vmatpush.msra.mxu0 %v851
        %915 = vmatpush.msra.mxu0 %v849
        %916 = vmatpush.msra.mxu0 %v847
        %917 = vmatpush.msra.mxu0 %v845
        %918 = vmatpush.msra.mxu0 %v843
        %919 = vmatpush.msra.mxu0 %v841
        %920 = vmatpush.msra.mxu0 %v839
        %921 = vmatpush.msra.mxu0 %v837
        %922 = vmatpush.msra.mxu0 %v835
        %923 = vmatpush.msra.mxu0 %v833
        %924 = vmatpush.msra.mxu0 %v831
        %925 = vmatmul.f32.gmra.mxu0 %v822
        %v926 = vpop.f32.mrf.mxu0
        %v927 = vadd.f32 %v865, %v926
        %928 = vmatmul.f32.gmra.mxu0 %v823
        %v929 = vpop.f32.mrf.mxu0
        %v930 = vadd.f32 %v865, %v929
        %931 = vmatmul.f32.gmra.mxu0 %v824
        %v932 = vpop.f32.mrf.mxu0
        %v933 = vadd.f32 %v865, %v932
        %934 = vmatmul.f32.gmra.mxu0 %v825
        %v935 = vpop.f32.mrf.mxu0
        %v936 = vadd.f32 %v865, %v935
        %937 = vmatmul.f32.gmra.mxu0 %v826
        %v938 = vpop.f32.mrf.mxu0
        %v939 = vadd.f32 %v865, %v938
        %940 = vmatmul.f32.gmra.mxu0 %v827
        %v941 = vpop.f32.mrf.mxu0
        %v942 = vadd.f32 %v865, %v941
        %943 = vmatmul.f32.gmra.mxu0 %v828
        %v944 = vpop.f32.mrf.mxu0
        %v945 = vadd.f32 %v865, %v944
        %946 = vmatmul.f32.gmra.mxu0 %v829
        %v947 = vpop.f32.mrf.mxu0
        %v948 = vadd.f32 %v865, %v947
        %949 = vdwg.mxu0
        %v950 = vld [vmem:[%s8] sm:$0xff]
        %v951 = vld [vmem:[%s8 + $0x8] sm:$0xff]
        %v952 = vld [vmem:[%s8 + $0x10] sm:$0xff]
        %v953 = vld [vmem:[%s8 + $0x18] sm:$0xff]
        %v954 = vld [vmem:[%s8 + $0x20] sm:$0xff]
        %v955 = vld [vmem:[%s8 + $0x28] sm:$0xff]
        %v956 = vld [vmem:[%s8 + $0x30] sm:$0xff]
        %v957 = vld [vmem:[%s8 + $0x38] sm:$0xff]
        %v958 = vld [vmem:[%s8 + $0x40] sm:$0xff]
        %v959 = vld [vmem:[%s8 + $0x48] sm:$0xff]
        %v960 = vld [vmem:[%s8 + $0x50] sm:$0xff]
        %v961 = vld [vmem:[%s8 + $0x58] sm:$0xff]
        %v962 = vld [vmem:[%s8 + $0x60] sm:$0xff]
        %v963 = vld [vmem:[%s8 + $0x68] sm:$0xff]
        %v964 = vld [vmem:[%s8 + $0x70] sm:$0xff]
        %v965 = vld [vmem:[%s8 + $0x78] sm:$0xff]
        %vm966 = vcmask 130048
        %v968 = vsel %vm966, %v950, 0
        %v971 = vsel %vm966, %v951, 0
        %v974 = vsel %vm966, %v952, 0
        %v977 = vsel %vm966, %v953, 0
        %v980 = vsel %vm966, %v954, 0
        %v983 = vsel %vm966, %v955, 0
        %v986 = vsel %vm966, %v956, 0
        %v989 = vsel %vm966, %v957, 0
        %v992 = vsel %vm966, %v958, 0
        %v995 = vsel %vm966, %v959, 0
        %v998 = vsel %vm966, %v960, 0
        %v1001 = vsel %vm966, %v961, 0
        %v1004 = vsel %vm966, %v962, 0
        %v1007 = vsel %vm966, %v963, 0
        %v1010 = vsel %vm966, %v964, 0
        %v1013 = vsel %vm966, %v965, 0
        %1015 = vmatpush.msra.mxu0 0.0
        %1016 = vmatpush.msra.mxu0 0.0
        %1017 = vmatpush.msra.mxu0 0.0
        %1018 = vmatpush.msra.mxu0 0.0
        %1019 = vmatpush.msra.mxu0 0.0
        %1020 = vmatpush.msra.mxu0 0.0
        %1021 = vmatpush.msra.mxu0 0.0
        %1022 = vmatpush.msra.mxu0 0.0
        %1023 = vmatpush.msra.mxu0 0.0
        %1024 = vmatpush.msra.mxu0 0.0
        %1025 = vmatpush.msra.mxu0 0.0
        %1026 = vmatpush.msra.mxu0 0.0
        %1027 = vmatpush.msra.mxu0 0.0
        %1028 = vmatpush.msra.mxu0 0.0
        %1029 = vmatpush.msra.mxu0 %v889
        %1030 = vmatpush.msra.mxu0 %v886
        %1031 = vmatmul.f32.gmra.mxu0 %v968
        %v1032 = vpop.f32.mrf.mxu0
        %v1033 = vadd.f32 0.0, %v1032
        %1034 = vmatmul.f32.gmra.mxu0 %v971
        %v1035 = vpop.f32.mrf.mxu0
        %v1036 = vadd.f32 0.0, %v1035
        %1037 = vmatmul.f32.gmra.mxu0 %v974
        %v1038 = vpop.f32.mrf.mxu0
        %v1039 = vadd.f32 0.0, %v1038
        %1040 = vmatmul.f32.gmra.mxu0 %v977
        %v1041 = vpop.f32.mrf.mxu0
        %v1042 = vadd.f32 0.0, %v1041
        %1043 = vmatmul.f32.gmra.mxu0 %v980
        %v1044 = vpop.f32.mrf.mxu0
        %v1045 = vadd.f32 0.0, %v1044
        %1046 = vmatmul.f32.gmra.mxu0 %v983
        %v1047 = vpop.f32.mrf.mxu0
        %v1048 = vadd.f32 0.0, %v1047
        %1049 = vmatmul.f32.gmra.mxu0 %v986
        %v1050 = vpop.f32.mrf.mxu0
        %v1051 = vadd.f32 0.0, %v1050
        %1052 = vmatmul.f32.gmra.mxu0 %v989
        %v1053 = vpop.f32.mrf.mxu0
        %v1054 = vadd.f32 0.0, %v1053
        %1055 = vmatmul.f32.gmra.mxu0 %v992
        %v1056 = vpop.f32.mrf.mxu0
        %v1057 = vadd.f32 0.0, %v1056
        %1058 = vmatmul.f32.gmra.mxu0 %v995
        %v1059 = vpop.f32.mrf.mxu0
        %v1060 = vadd.f32 0.0, %v1059
        %1061 = vmatmul.f32.gmra.mxu0 %v998
        %v1062 = vpop.f32.mrf.mxu0
        %v1063 = vadd.f32 0.0, %v1062
        %1064 = vmatmul.f32.gmra.mxu0 %v1001
        %v1065 = vpop.f32.mrf.mxu0
        %v1066 = vadd.f32 0.0, %v1065
        %1067 = vmatmul.f32.gmra.mxu0 %v1004
        %v1068 = vpop.f32.mrf.mxu0
        %v1069 = vadd.f32 0.0, %v1068
        %1070 = vmatmul.f32.gmra.mxu0 %v1007
        %v1071 = vpop.f32.mrf.mxu0
        %v1072 = vadd.f32 0.0, %v1071
        %1073 = vmatmul.f32.gmra.mxu0 %v1010
        %v1074 = vpop.f32.mrf.mxu0
        %v1075 = vadd.f32 0.0, %v1074
        %1076 = vmatmul.f32.gmra.mxu0 %v1013
        %v1077 = vpop.f32.mrf.mxu0
        %v1078 = vadd.f32 0.0, %v1077
        %1079 = vdwg.mxu0
        %1080 = vmatpush.msra.mxu0 0.0
        %1081 = vmatpush.msra.mxu0 0.0
        %1082 = vmatpush.msra.mxu0 0.0
        %1083 = vmatpush.msra.mxu0 0.0
        %1084 = vmatpush.msra.mxu0 0.0
        %1085 = vmatpush.msra.mxu0 0.0
        %1086 = vmatpush.msra.mxu0 0.0
        %1087 = vmatpush.msra.mxu0 0.0
        %1088 = vmatpush.msra.mxu0 0.0
        %1089 = vmatpush.msra.mxu0 0.0
        %1090 = vmatpush.msra.mxu0 0.0
        %1091 = vmatpush.msra.mxu0 0.0
        %1092 = vmatpush.msra.mxu0 0.0
        %1093 = vmatpush.msra.mxu0 0.0
        %1094 = vmatpush.msra.mxu0 %v930
        %1095 = vmatpush.msra.mxu0 %v927
        %1096 = vmatmul.f32.gmra.mxu0 %v968
        %v1097 = vpop.f32.mrf.mxu0
        %v1098 = vadd.f32 0.0, %v1097
        %1099 = vmatmul.f32.gmra.mxu0 %v971
        %v1100 = vpop.f32.mrf.mxu0
        %v1101 = vadd.f32 0.0, %v1100
        %1102 = vmatmul.f32.gmra.mxu0 %v974
        %v1103 = vpop.f32.mrf.mxu0
        %v1104 = vadd.f32 0.0, %v1103
        %1105 = vmatmul.f32.gmra.mxu0 %v977
        %v1106 = vpop.f32.mrf.mxu0
        %v1107 = vadd.f32 0.0, %v1106
        %1108 = vmatmul.f32.gmra.mxu0 %v980
        %v1109 = vpop.f32.mrf.mxu0
        %v1110 = vadd.f32 0.0, %v1109
        %1111 = vmatmul.f32.gmra.mxu0 %v983
        %v1112 = vpop.f32.mrf.mxu0
        %v1113 = vadd.f32 0.0, %v1112
        %1114 = vmatmul.f32.gmra.mxu0 %v986
        %v1115 = vpop.f32.mrf.mxu0
        %v1116 = vadd.f32 0.0, %v1115
        %1117 = vmatmul.f32.gmra.mxu0 %v989
        %v1118 = vpop.f32.mrf.mxu0
        %v1119 = vadd.f32 0.0, %v1118
        %1120 = vmatmul.f32.gmra.mxu0 %v992
        %v1121 = vpop.f32.mrf.mxu0
        %v1122 = vadd.f32 0.0, %v1121
        %1123 = vmatmul.f32.gmra.mxu0 %v995
        %v1124 = vpop.f32.mrf.mxu0
        %v1125 = vadd.f32 0.0, %v1124
        %1126 = vmatmul.f32.gmra.mxu0 %v998
        %v1127 = vpop.f32.mrf.mxu0
        %v1128 = vadd.f32 0.0, %v1127
        %1129 = vmatmul.f32.gmra.mxu0 %v1001
        %v1130 = vpop.f32.mrf.mxu0
        %v1131 = vadd.f32 0.0, %v1130
        %1132 = vmatmul.f32.gmra.mxu0 %v1004
        %v1133 = vpop.f32.mrf.mxu0
        %v1134 = vadd.f32 0.0, %v1133
        %1135 = vmatmul.f32.gmra.mxu0 %v1007
        %v1136 = vpop.f32.mrf.mxu0
        %v1137 = vadd.f32 0.0, %v1136
        %1138 = vmatmul.f32.gmra.mxu0 %v1010
        %v1139 = vpop.f32.mrf.mxu0
        %v1140 = vadd.f32 0.0, %v1139
        %1141 = vmatmul.f32.gmra.mxu0 %v1013
        %v1142 = vpop.f32.mrf.mxu0
        %v1143 = vadd.f32 0.0, %v1142
        %1144 = vdwg.mxu0
        %1145 = vst [vmem:[%s343] sm:$0xff] %v1033
        %1146 = vst [vmem:[%s343 + $0x8] sm:$0xff] %v1036
        %1147 = vst [vmem:[%s343 + $0x10] sm:$0xff] %v1039
        %1148 = vst [vmem:[%s343 + $0x18] sm:$0xff] %v1042
        %1149 = vst [vmem:[%s343 + $0x20] sm:$0xff] %v1045
        %1150 = vst [vmem:[%s343 + $0x28] sm:$0xff] %v1048
        %1151 = vst [vmem:[%s343 + $0x30] sm:$0xff] %v1051
        %1152 = vst [vmem:[%s343 + $0x38] sm:$0xff] %v1054
        %1153 = vst [vmem:[%s343 + $0x40] sm:$0xff] %v1057
        %1154 = vst [vmem:[%s343 + $0x48] sm:$0xff] %v1060
        %1155 = vst [vmem:[%s343 + $0x50] sm:$0xff] %v1063
        %1156 = vst [vmem:[%s343 + $0x58] sm:$0xff] %v1066
        %1157 = vst [vmem:[%s343 + $0x60] sm:$0xff] %v1069
        %1158 = vst [vmem:[%s343 + $0x68] sm:$0xff] %v1072
        %1159 = vst [vmem:[%s343 + $0x70] sm:$0xff] %v1075
        %1160 = vst [vmem:[%s343 + $0x78] sm:$0xff] %v1078
        %s1161 = scalar_lea.vmem %s343, 128 [#allocation6]
        %1162 = vst [vmem:[%s1161] sm:$0xff] %v1098
        %1163 = vst [vmem:[%s1161 + $0x8] sm:$0xff] %v1101
        %1164 = vst [vmem:[%s1161 + $0x10] sm:$0xff] %v1104
        %1165 = vst [vmem:[%s1161 + $0x18] sm:$0xff] %v1107
        %1166 = vst [vmem:[%s1161 + $0x20] sm:$0xff] %v1110
        %1167 = vst [vmem:[%s1161 + $0x28] sm:$0xff] %v1113
        %1168 = vst [vmem:[%s1161 + $0x30] sm:$0xff] %v1116
        %1169 = vst [vmem:[%s1161 + $0x38] sm:$0xff] %v1119
        %1170 = vst [vmem:[%s1161 + $0x40] sm:$0xff] %v1122
        %1171 = vst [vmem:[%s1161 + $0x48] sm:$0xff] %v1125
        %1172 = vst [vmem:[%s1161 + $0x50] sm:$0xff] %v1128
        %1173 = vst [vmem:[%s1161 + $0x58] sm:$0xff] %v1131
        %1174 = vst [vmem:[%s1161 + $0x60] sm:$0xff] %v1134
        %1175 = vst [vmem:[%s1161 + $0x68] sm:$0xff] %v1137
        %1176 = vst [vmem:[%s1161 + $0x70] sm:$0xff] %v1140
        %1177 = vst [vmem:[%s1161 + $0x78] sm:$0xff] %v1143
        %1178 = vmatpush.msra.mxu0 0.0
        %1179 = vmatpush.msra.mxu0 0.0
        %1180 = vmatpush.msra.mxu0 0.0
        %1181 = vmatpush.msra.mxu0 0.0
        %1182 = vmatpush.msra.mxu0 0.0
        %1183 = vmatpush.msra.mxu0 0.0
        %1184 = vmatpush.msra.mxu0 0.0
        %1185 = vmatpush.msra.mxu0 0.0
        %1186 = vmatpush.msra.mxu0 0.0
        %1187 = vmatpush.msra.mxu0 0.0
        %1188 = vmatpush.msra.mxu0 0.0
        %1189 = vmatpush.msra.mxu0 0.0
        %1190 = vmatpush.msra.mxu0 0.0
        %1191 = vmatpush.msra.mxu0 0.0
        %1192 = vmatpush.msra.mxu0 %v895
        %1193 = vmatpush.msra.mxu0 %v892
        %1194 = vmatmul.f32.gmra.mxu0 %v968
        %v1195 = vpop.f32.mrf.mxu0
        %v1196 = vadd.f32 0.0, %v1195
        %1197 = vmatmul.f32.gmra.mxu0 %v971
        %v1198 = vpop.f32.mrf.mxu0
        %v1199 = vadd.f32 0.0, %v1198
        %1200 = vmatmul.f32.gmra.mxu0 %v974
        %v1201 = vpop.f32.mrf.mxu0
        %v1202 = vadd.f32 0.0, %v1201
        %1203 = vmatmul.f32.gmra.mxu0 %v977
        %v1204 = vpop.f32.mrf.mxu0
        %v1205 = vadd.f32 0.0, %v1204
        %1206 = vmatmul.f32.gmra.mxu0 %v980
        %v1207 = vpop.f32.mrf.mxu0
        %v1208 = vadd.f32 0.0, %v1207
        %1209 = vmatmul.f32.gmra.mxu0 %v983
        %v1210 = vpop.f32.mrf.mxu0
        %v1211 = vadd.f32 0.0, %v1210
        %1212 = vmatmul.f32.gmra.mxu0 %v986
        %v1213 = vpop.f32.mrf.mxu0
        %v1214 = vadd.f32 0.0, %v1213
        %1215 = vmatmul.f32.gmra.mxu0 %v989
        %v1216 = vpop.f32.mrf.mxu0
        %v1217 = vadd.f32 0.0, %v1216
        %1218 = vmatmul.f32.gmra.mxu0 %v992
        %v1219 = vpop.f32.mrf.mxu0
        %v1220 = vadd.f32 0.0, %v1219
        %1221 = vmatmul.f32.gmra.mxu0 %v995
        %v1222 = vpop.f32.mrf.mxu0
        %v1223 = vadd.f32 0.0, %v1222
        %1224 = vmatmul.f32.gmra.mxu0 %v998
        %v1225 = vpop.f32.mrf.mxu0
        %v1226 = vadd.f32 0.0, %v1225
        %1227 = vmatmul.f32.gmra.mxu0 %v1001
        %v1228 = vpop.f32.mrf.mxu0
        %v1229 = vadd.f32 0.0, %v1228
        %1230 = vmatmul.f32.gmra.mxu0 %v1004
        %v1231 = vpop.f32.mrf.mxu0
        %v1232 = vadd.f32 0.0, %v1231
        %1233 = vmatmul.f32.gmra.mxu0 %v1007
        %v1234 = vpop.f32.mrf.mxu0
        %v1235 = vadd.f32 0.0, %v1234
        %1236 = vmatmul.f32.gmra.mxu0 %v1010
        %v1237 = vpop.f32.mrf.mxu0
        %v1238 = vadd.f32 0.0, %v1237
        %1239 = vmatmul.f32.gmra.mxu0 %v1013
        %v1240 = vpop.f32.mrf.mxu0
        %v1241 = vadd.f32 0.0, %v1240
        %1242 = vdwg.mxu0
        %1243 = vmatpush.msra.mxu0 0.0
        %1244 = vmatpush.msra.mxu0 0.0
        %1245 = vmatpush.msra.mxu0 0.0
        %1246 = vmatpush.msra.mxu0 0.0
        %1247 = vmatpush.msra.mxu0 0.0
        %1248 = vmatpush.msra.mxu0 0.0
        %1249 = vmatpush.msra.mxu0 0.0
        %1250 = vmatpush.msra.mxu0 0.0
        %1251 = vmatpush.msra.mxu0 0.0
        %1252 = vmatpush.msra.mxu0 0.0
        %1253 = vmatpush.msra.mxu0 0.0
        %1254 = vmatpush.msra.mxu0 0.0
        %1255 = vmatpush.msra.mxu0 0.0
        %1256 = vmatpush.msra.mxu0 0.0
        %1257 = vmatpush.msra.mxu0 %v936
        %1258 = vmatpush.msra.mxu0 %v933
        %1259 = vmatmul.f32.gmra.mxu0 %v968
        %v1260 = vpop.f32.mrf.mxu0
        %v1261 = vadd.f32 0.0, %v1260
        %1262 = vmatmul.f32.gmra.mxu0 %v971
        %v1263 = vpop.f32.mrf.mxu0
        %v1264 = vadd.f32 0.0, %v1263
        %1265 = vmatmul.f32.gmra.mxu0 %v974
        %v1266 = vpop.f32.mrf.mxu0
        %v1267 = vadd.f32 0.0, %v1266
        %1268 = vmatmul.f32.gmra.mxu0 %v977
        %v1269 = vpop.f32.mrf.mxu0
        %v1270 = vadd.f32 0.0, %v1269
        %1271 = vmatmul.f32.gmra.mxu0 %v980
        %v1272 = vpop.f32.mrf.mxu0
        %v1273 = vadd.f32 0.0, %v1272
        %1274 = vmatmul.f32.gmra.mxu0 %v983
        %v1275 = vpop.f32.mrf.mxu0
        %v1276 = vadd.f32 0.0, %v1275
        %1277 = vmatmul.f32.gmra.mxu0 %v986
        %v1278 = vpop.f32.mrf.mxu0
        %v1279 = vadd.f32 0.0, %v1278
        %1280 = vmatmul.f32.gmra.mxu0 %v989
        %v1281 = vpop.f32.mrf.mxu0
        %v1282 = vadd.f32 0.0, %v1281
        %1283 = vmatmul.f32.gmra.mxu0 %v992
        %v1284 = vpop.f32.mrf.mxu0
        %v1285 = vadd.f32 0.0, %v1284
        %1286 = vmatmul.f32.gmra.mxu0 %v995
        %v1287 = vpop.f32.mrf.mxu0
        %v1288 = vadd.f32 0.0, %v1287
        %1289 = vmatmul.f32.gmra.mxu0 %v998
        %v1290 = vpop.f32.mrf.mxu0
        %v1291 = vadd.f32 0.0, %v1290
        %1292 = vmatmul.f32.gmra.mxu0 %v1001
        %v1293 = vpop.f32.mrf.mxu0
        %v1294 = vadd.f32 0.0, %v1293
        %1295 = vmatmul.f32.gmra.mxu0 %v1004
        %v1296 = vpop.f32.mrf.mxu0
        %v1297 = vadd.f32 0.0, %v1296
        %1298 = vmatmul.f32.gmra.mxu0 %v1007
        %v1299 = vpop.f32.mrf.mxu0
        %v1300 = vadd.f32 0.0, %v1299
        %1301 = vmatmul.f32.gmra.mxu0 %v1010
        %v1302 = vpop.f32.mrf.mxu0
        %v1303 = vadd.f32 0.0, %v1302
        %1304 = vmatmul.f32.gmra.mxu0 %v1013
        %v1305 = vpop.f32.mrf.mxu0
        %v1306 = vadd.f32 0.0, %v1305
        %1307 = vdwg.mxu0
        %s1308 = scalar_lea.vmem %s343, 256 [#allocation6]
        %1309 = vst [vmem:[%s1308] sm:$0xff] %v1196
        %1310 = vst [vmem:[%s1308 + $0x8] sm:$0xff] %v1199
        %1311 = vst [vmem:[%s1308 + $0x10] sm:$0xff] %v1202
        %1312 = vst [vmem:[%s1308 + $0x18] sm:$0xff] %v1205
        %1313 = vst [vmem:[%s1308 + $0x20] sm:$0xff] %v1208
        %1314 = vst [vmem:[%s1308 + $0x28] sm:$0xff] %v1211
        %1315 = vst [vmem:[%s1308 + $0x30] sm:$0xff] %v1214
        %1316 = vst [vmem:[%s1308 + $0x38] sm:$0xff] %v1217
        %1317 = vst [vmem:[%s1308 + $0x40] sm:$0xff] %v1220
        %1318 = vst [vmem:[%s1308 + $0x48] sm:$0xff] %v1223
        %1319 = vst [vmem:[%s1308 + $0x50] sm:$0xff] %v1226
        %1320 = vst [vmem:[%s1308 + $0x58] sm:$0xff] %v1229
        %1321 = vst [vmem:[%s1308 + $0x60] sm:$0xff] %v1232
        %1322 = vst [vmem:[%s1308 + $0x68] sm:$0xff] %v1235
        %1323 = vst [vmem:[%s1308 + $0x70] sm:$0xff] %v1238
        %1324 = vst [vmem:[%s1308 + $0x78] sm:$0xff] %v1241
        %s1325 = scalar_lea.vmem %s343, 384 [#allocation6]
        %1326 = vst [vmem:[%s1325] sm:$0xff] %v1261
        %1327 = vst [vmem:[%s1325 + $0x8] sm:$0xff] %v1264
        %1328 = vst [vmem:[%s1325 + $0x10] sm:$0xff] %v1267
        %1329 = vst [vmem:[%s1325 + $0x18] sm:$0xff] %v1270
        %1330 = vst [vmem:[%s1325 + $0x20] sm:$0xff] %v1273
        %1331 = vst [vmem:[%s1325 + $0x28] sm:$0xff] %v1276
        %1332 = vst [vmem:[%s1325 + $0x30] sm:$0xff] %v1279
        %1333 = vst [vmem:[%s1325 + $0x38] sm:$0xff] %v1282
        %1334 = vst [vmem:[%s1325 + $0x40] sm:$0xff] %v1285
        %1335 = vst [vmem:[%s1325 + $0x48] sm:$0xff] %v1288
        %1336 = vst [vmem:[%s1325 + $0x50] sm:$0xff] %v1291
        %1337 = vst [vmem:[%s1325 + $0x58] sm:$0xff] %v1294
        %1338 = vst [vmem:[%s1325 + $0x60] sm:$0xff] %v1297
        %1339 = vst [vmem:[%s1325 + $0x68] sm:$0xff] %v1300
        %1340 = vst [vmem:[%s1325 + $0x70] sm:$0xff] %v1303
        %1341 = vst [vmem:[%s1325 + $0x78] sm:$0xff] %v1306
        %1342 = vmatpush.msra.mxu0 0.0
        %1343 = vmatpush.msra.mxu0 0.0
        %1344 = vmatpush.msra.mxu0 0.0
        %1345 = vmatpush.msra.mxu0 0.0
        %1346 = vmatpush.msra.mxu0 0.0
        %1347 = vmatpush.msra.mxu0 0.0
        %1348 = vmatpush.msra.mxu0 0.0
        %1349 = vmatpush.msra.mxu0 0.0
        %1350 = vmatpush.msra.mxu0 0.0
        %1351 = vmatpush.msra.mxu0 0.0
        %1352 = vmatpush.msra.mxu0 0.0
        %1353 = vmatpush.msra.mxu0 0.0
        %1354 = vmatpush.msra.mxu0 0.0
        %1355 = vmatpush.msra.mxu0 0.0
        %1356 = vmatpush.msra.mxu0 %v901
        %1357 = vmatpush.msra.mxu0 %v898
        %1358 = vmatmul.f32.gmra.mxu0 %v968
        %v1359 = vpop.f32.mrf.mxu0
        %v1360 = vadd.f32 0.0, %v1359
        %1361 = vmatmul.f32.gmra.mxu0 %v971
        %v1362 = vpop.f32.mrf.mxu0
        %v1363 = vadd.f32 0.0, %v1362
        %1364 = vmatmul.f32.gmra.mxu0 %v974
        %v1365 = vpop.f32.mrf.mxu0
        %v1366 = vadd.f32 0.0, %v1365
        %1367 = vmatmul.f32.gmra.mxu0 %v977
        %v1368 = vpop.f32.mrf.mxu0
        %v1369 = vadd.f32 0.0, %v1368
        %1370 = vmatmul.f32.gmra.mxu0 %v980
        %v1371 = vpop.f32.mrf.mxu0
        %v1372 = vadd.f32 0.0, %v1371
        %1373 = vmatmul.f32.gmra.mxu0 %v983
        %v1374 = vpop.f32.mrf.mxu0
        %v1375 = vadd.f32 0.0, %v1374
        %1376 = vmatmul.f32.gmra.mxu0 %v986
        %v1377 = vpop.f32.mrf.mxu0
        %v1378 = vadd.f32 0.0, %v1377
        %1379 = vmatmul.f32.gmra.mxu0 %v989
        %v1380 = vpop.f32.mrf.mxu0
        %v1381 = vadd.f32 0.0, %v1380
        %1382 = vmatmul.f32.gmra.mxu0 %v992
        %v1383 = vpop.f32.mrf.mxu0
        %v1384 = vadd.f32 0.0, %v1383
        %1385 = vmatmul.f32.gmra.mxu0 %v995
        %v1386 = vpop.f32.mrf.mxu0
        %v1387 = vadd.f32 0.0, %v1386
        %1388 = vmatmul.f32.gmra.mxu0 %v998
        %v1389 = vpop.f32.mrf.mxu0
        %v1390 = vadd.f32 0.0, %v1389
        %1391 = vmatmul.f32.gmra.mxu0 %v1001
        %v1392 = vpop.f32.mrf.mxu0
        %v1393 = vadd.f32 0.0, %v1392
        %1394 = vmatmul.f32.gmra.mxu0 %v1004
        %v1395 = vpop.f32.mrf.mxu0
        %v1396 = vadd.f32 0.0, %v1395
        %1397 = vmatmul.f32.gmra.mxu0 %v1007
        %v1398 = vpop.f32.mrf.mxu0
        %v1399 = vadd.f32 0.0, %v1398
        %1400 = vmatmul.f32.gmra.mxu0 %v1010
        %v1401 = vpop.f32.mrf.mxu0
        %v1402 = vadd.f32 0.0, %v1401
        %1403 = vmatmul.f32.gmra.mxu0 %v1013
        %v1404 = vpop.f32.mrf.mxu0
        %v1405 = vadd.f32 0.0, %v1404
        %1406 = vdwg.mxu0
        %1407 = vmatpush.msra.mxu0 0.0
        %1408 = vmatpush.msra.mxu0 0.0
        %1409 = vmatpush.msra.mxu0 0.0
        %1410 = vmatpush.msra.mxu0 0.0
        %1411 = vmatpush.msra.mxu0 0.0
        %1412 = vmatpush.msra.mxu0 0.0
        %1413 = vmatpush.msra.mxu0 0.0
        %1414 = vmatpush.msra.mxu0 0.0
        %1415 = vmatpush.msra.mxu0 0.0
        %1416 = vmatpush.msra.mxu0 0.0
        %1417 = vmatpush.msra.mxu0 0.0
        %1418 = vmatpush.msra.mxu0 0.0
        %1419 = vmatpush.msra.mxu0 0.0
        %1420 = vmatpush.msra.mxu0 0.0
        %1421 = vmatpush.msra.mxu0 %v942
        %1422 = vmatpush.msra.mxu0 %v939
        %1423 = vmatmul.f32.gmra.mxu0 %v968
        %v1424 = vpop.f32.mrf.mxu0
        %v1425 = vadd.f32 0.0, %v1424
        %1426 = vmatmul.f32.gmra.mxu0 %v971
        %v1427 = vpop.f32.mrf.mxu0
        %v1428 = vadd.f32 0.0, %v1427
        %1429 = vmatmul.f32.gmra.mxu0 %v974
        %v1430 = vpop.f32.mrf.mxu0
        %v1431 = vadd.f32 0.0, %v1430
        %1432 = vmatmul.f32.gmra.mxu0 %v977
        %v1433 = vpop.f32.mrf.mxu0
        %v1434 = vadd.f32 0.0, %v1433
        %1435 = vmatmul.f32.gmra.mxu0 %v980
        %v1436 = vpop.f32.mrf.mxu0
        %v1437 = vadd.f32 0.0, %v1436
        %1438 = vmatmul.f32.gmra.mxu0 %v983
        %v1439 = vpop.f32.mrf.mxu0
        %v1440 = vadd.f32 0.0, %v1439
        %1441 = vmatmul.f32.gmra.mxu0 %v986
        %v1442 = vpop.f32.mrf.mxu0
        %v1443 = vadd.f32 0.0, %v1442
        %1444 = vmatmul.f32.gmra.mxu0 %v989
        %v1445 = vpop.f32.mrf.mxu0
        %v1446 = vadd.f32 0.0, %v1445
        %1447 = vmatmul.f32.gmra.mxu0 %v992
        %v1448 = vpop.f32.mrf.mxu0
        %v1449 = vadd.f32 0.0, %v1448
        %1450 = vmatmul.f32.gmra.mxu0 %v995
        %v1451 = vpop.f32.mrf.mxu0
        %v1452 = vadd.f32 0.0, %v1451
        %1453 = vmatmul.f32.gmra.mxu0 %v998
        %v1454 = vpop.f32.mrf.mxu0
        %v1455 = vadd.f32 0.0, %v1454
        %1456 = vmatmul.f32.gmra.mxu0 %v1001
        %v1457 = vpop.f32.mrf.mxu0
        %v1458 = vadd.f32 0.0, %v1457
        %1459 = vmatmul.f32.gmra.mxu0 %v1004
        %v1460 = vpop.f32.mrf.mxu0
        %v1461 = vadd.f32 0.0, %v1460
        %1462 = vmatmul.f32.gmra.mxu0 %v1007
        %v1463 = vpop.f32.mrf.mxu0
        %v1464 = vadd.f32 0.0, %v1463
        %1465 = vmatmul.f32.gmra.mxu0 %v1010
        %v1466 = vpop.f32.mrf.mxu0
        %v1467 = vadd.f32 0.0, %v1466
        %1468 = vmatmul.f32.gmra.mxu0 %v1013
        %v1469 = vpop.f32.mrf.mxu0
        %v1470 = vadd.f32 0.0, %v1469
        %1471 = vdwg.mxu0
        %s1472 = scalar_lea.vmem %s343, 512 [#allocation6]
        %1473 = vst [vmem:[%s1472] sm:$0xff] %v1360
        %1474 = vst [vmem:[%s1472 + $0x8] sm:$0xff] %v1363
        %1475 = vst [vmem:[%s1472 + $0x10] sm:$0xff] %v1366
        %1476 = vst [vmem:[%s1472 + $0x18] sm:$0xff] %v1369
        %1477 = vst [vmem:[%s1472 + $0x20] sm:$0xff] %v1372
        %1478 = vst [vmem:[%s1472 + $0x28] sm:$0xff] %v1375
        %1479 = vst [vmem:[%s1472 + $0x30] sm:$0xff] %v1378
        %1480 = vst [vmem:[%s1472 + $0x38] sm:$0xff] %v1381
        %1481 = vst [vmem:[%s1472 + $0x40] sm:$0xff] %v1384
        %1482 = vst [vmem:[%s1472 + $0x48] sm:$0xff] %v1387
        %1483 = vst [vmem:[%s1472 + $0x50] sm:$0xff] %v1390
        %1484 = vst [vmem:[%s1472 + $0x58] sm:$0xff] %v1393
        %1485 = vst [vmem:[%s1472 + $0x60] sm:$0xff] %v1396
        %1486 = vst [vmem:[%s1472 + $0x68] sm:$0xff] %v1399
        %1487 = vst [vmem:[%s1472 + $0x70] sm:$0xff] %v1402
        %1488 = vst [vmem:[%s1472 + $0x78] sm:$0xff] %v1405
        %s1489 = scalar_lea.vmem %s343, 640 [#allocation6]
        %1490 = vst [vmem:[%s1489] sm:$0xff] %v1425
        %1491 = vst [vmem:[%s1489 + $0x8] sm:$0xff] %v1428
        %1492 = vst [vmem:[%s1489 + $0x10] sm:$0xff] %v1431
        %1493 = vst [vmem:[%s1489 + $0x18] sm:$0xff] %v1434
        %1494 = vst [vmem:[%s1489 + $0x20] sm:$0xff] %v1437
        %1495 = vst [vmem:[%s1489 + $0x28] sm:$0xff] %v1440
        %1496 = vst [vmem:[%s1489 + $0x30] sm:$0xff] %v1443
        %1497 = vst [vmem:[%s1489 + $0x38] sm:$0xff] %v1446
        %1498 = vst [vmem:[%s1489 + $0x40] sm:$0xff] %v1449
        %1499 = vst [vmem:[%s1489 + $0x48] sm:$0xff] %v1452
        %1500 = vst [vmem:[%s1489 + $0x50] sm:$0xff] %v1455
        %1501 = vst [vmem:[%s1489 + $0x58] sm:$0xff] %v1458
        %1502 = vst [vmem:[%s1489 + $0x60] sm:$0xff] %v1461
        %1503 = vst [vmem:[%s1489 + $0x68] sm:$0xff] %v1464
        %1504 = vst [vmem:[%s1489 + $0x70] sm:$0xff] %v1467
        %1505 = vst [vmem:[%s1489 + $0x78] sm:$0xff] %v1470
        %1506 = vmatpush.msra.mxu0 0.0
        %1507 = vmatpush.msra.mxu0 0.0
        %1508 = vmatpush.msra.mxu0 0.0
        %1509 = vmatpush.msra.mxu0 0.0
        %1510 = vmatpush.msra.mxu0 0.0
        %1511 = vmatpush.msra.mxu0 0.0
        %1512 = vmatpush.msra.mxu0 0.0
        %1513 = vmatpush.msra.mxu0 0.0
        %1514 = vmatpush.msra.mxu0 0.0
        %1515 = vmatpush.msra.mxu0 0.0
        %1516 = vmatpush.msra.mxu0 0.0
        %1517 = vmatpush.msra.mxu0 0.0
        %1518 = vmatpush.msra.mxu0 0.0
        %1519 = vmatpush.msra.mxu0 0.0
        %1520 = vmatpush.msra.mxu0 %v907
        %1521 = vmatpush.msra.mxu0 %v904
        %1522 = vmatmul.f32.gmra.mxu0 %v968
        %v1523 = vpop.f32.mrf.mxu0
        %v1524 = vadd.f32 0.0, %v1523
        %1525 = vmatmul.f32.gmra.mxu0 %v971
        %v1526 = vpop.f32.mrf.mxu0
        %v1527 = vadd.f32 0.0, %v1526
        %1528 = vmatmul.f32.gmra.mxu0 %v974
        %v1529 = vpop.f32.mrf.mxu0
        %v1530 = vadd.f32 0.0, %v1529
        %1531 = vmatmul.f32.gmra.mxu0 %v977
        %v1532 = vpop.f32.mrf.mxu0
        %v1533 = vadd.f32 0.0, %v1532
        %1534 = vmatmul.f32.gmra.mxu0 %v980
        %v1535 = vpop.f32.mrf.mxu0
        %v1536 = vadd.f32 0.0, %v1535
        %1537 = vmatmul.f32.gmra.mxu0 %v983
        %v1538 = vpop.f32.mrf.mxu0
        %v1539 = vadd.f32 0.0, %v1538
        %1540 = vmatmul.f32.gmra.mxu0 %v986
        %v1541 = vpop.f32.mrf.mxu0
        %v1542 = vadd.f32 0.0, %v1541
        %1543 = vmatmul.f32.gmra.mxu0 %v989
        %v1544 = vpop.f32.mrf.mxu0
        %v1545 = vadd.f32 0.0, %v1544
        %1546 = vmatmul.f32.gmra.mxu0 %v992
        %v1547 = vpop.f32.mrf.mxu0
        %v1548 = vadd.f32 0.0, %v1547
        %1549 = vmatmul.f32.gmra.mxu0 %v995
        %v1550 = vpop.f32.mrf.mxu0
        %v1551 = vadd.f32 0.0, %v1550
        %1552 = vmatmul.f32.gmra.mxu0 %v998
        %v1553 = vpop.f32.mrf.mxu0
        %v1554 = vadd.f32 0.0, %v1553
        %1555 = vmatmul.f32.gmra.mxu0 %v1001
        %v1556 = vpop.f32.mrf.mxu0
        %v1557 = vadd.f32 0.0, %v1556
        %1558 = vmatmul.f32.gmra.mxu0 %v1004
        %v1559 = vpop.f32.mrf.mxu0
        %v1560 = vadd.f32 0.0, %v1559
        %1561 = vmatmul.f32.gmra.mxu0 %v1007
        %v1562 = vpop.f32.mrf.mxu0
        %v1563 = vadd.f32 0.0, %v1562
        %1564 = vmatmul.f32.gmra.mxu0 %v1010
        %v1565 = vpop.f32.mrf.mxu0
        %v1566 = vadd.f32 0.0, %v1565
        %1567 = vmatmul.f32.gmra.mxu0 %v1013
        %v1568 = vpop.f32.mrf.mxu0
        %v1569 = vadd.f32 0.0, %v1568
        %1570 = vdwg.mxu0
        %1571 = vmatpush.msra.mxu0 0.0
        %1572 = vmatpush.msra.mxu0 0.0
        %1573 = vmatpush.msra.mxu0 0.0
        %1574 = vmatpush.msra.mxu0 0.0
        %1575 = vmatpush.msra.mxu0 0.0
        %1576 = vmatpush.msra.mxu0 0.0
        %1577 = vmatpush.msra.mxu0 0.0
        %1578 = vmatpush.msra.mxu0 0.0
        %1579 = vmatpush.msra.mxu0 0.0
        %1580 = vmatpush.msra.mxu0 0.0
        %1581 = vmatpush.msra.mxu0 0.0
        %1582 = vmatpush.msra.mxu0 0.0
        %1583 = vmatpush.msra.mxu0 0.0
        %1584 = vmatpush.msra.mxu0 0.0
        %1585 = vmatpush.msra.mxu0 %v948
        %1586 = vmatpush.msra.mxu0 %v945
        %1587 = vmatmul.f32.gmra.mxu0 %v968
        %v1588 = vpop.f32.mrf.mxu0
        %v1589 = vadd.f32 0.0, %v1588
        %1590 = vmatmul.f32.gmra.mxu0 %v971
        %v1591 = vpop.f32.mrf.mxu0
        %v1592 = vadd.f32 0.0, %v1591
        %1593 = vmatmul.f32.gmra.mxu0 %v974
        %v1594 = vpop.f32.mrf.mxu0
        %v1595 = vadd.f32 0.0, %v1594
        %1596 = vmatmul.f32.gmra.mxu0 %v977
        %v1597 = vpop.f32.mrf.mxu0
        %v1598 = vadd.f32 0.0, %v1597
        %1599 = vmatmul.f32.gmra.mxu0 %v980
        %v1600 = vpop.f32.mrf.mxu0
        %v1601 = vadd.f32 0.0, %v1600
        %1602 = vmatmul.f32.gmra.mxu0 %v983
        %v1603 = vpop.f32.mrf.mxu0
        %v1604 = vadd.f32 0.0, %v1603
        %1605 = vmatmul.f32.gmra.mxu0 %v986
        %v1606 = vpop.f32.mrf.mxu0
        %v1607 = vadd.f32 0.0, %v1606
        %1608 = vmatmul.f32.gmra.mxu0 %v989
        %v1609 = vpop.f32.mrf.mxu0
        %v1610 = vadd.f32 0.0, %v1609
        %1611 = vmatmul.f32.gmra.mxu0 %v992
        %v1612 = vpop.f32.mrf.mxu0
        %v1613 = vadd.f32 0.0, %v1612
        %1614 = vmatmul.f32.gmra.mxu0 %v995
        %v1615 = vpop.f32.mrf.mxu0
        %v1616 = vadd.f32 0.0, %v1615
        %1617 = vmatmul.f32.gmra.mxu0 %v998
        %v1618 = vpop.f32.mrf.mxu0
        %v1619 = vadd.f32 0.0, %v1618
        %1620 = vmatmul.f32.gmra.mxu0 %v1001
        %v1621 = vpop.f32.mrf.mxu0
        %v1622 = vadd.f32 0.0, %v1621
        %1623 = vmatmul.f32.gmra.mxu0 %v1004
        %v1624 = vpop.f32.mrf.mxu0
        %v1625 = vadd.f32 0.0, %v1624
        %1626 = vmatmul.f32.gmra.mxu0 %v1007
        %v1627 = vpop.f32.mrf.mxu0
        %v1628 = vadd.f32 0.0, %v1627
        %1629 = vmatmul.f32.gmra.mxu0 %v1010
        %v1630 = vpop.f32.mrf.mxu0
        %v1631 = vadd.f32 0.0, %v1630
        %1632 = vmatmul.f32.gmra.mxu0 %v1013
        %v1633 = vpop.f32.mrf.mxu0
        %v1634 = vadd.f32 0.0, %v1633
        %1635 = vdwg.mxu0
        %s1636 = scalar_lea.vmem %s343, 768 [#allocation6]
        %1637 = vst [vmem:[%s1636] sm:$0xff] %v1524
        %1638 = vst [vmem:[%s1636 + $0x8] sm:$0xff] %v1527
        %1639 = vst [vmem:[%s1636 + $0x10] sm:$0xff] %v1530
        %1640 = vst [vmem:[%s1636 + $0x18] sm:$0xff] %v1533
        %1641 = vst [vmem:[%s1636 + $0x20] sm:$0xff] %v1536
        %1642 = vst [vmem:[%s1636 + $0x28] sm:$0xff] %v1539
        %1643 = vst [vmem:[%s1636 + $0x30] sm:$0xff] %v1542
        %1644 = vst [vmem:[%s1636 + $0x38] sm:$0xff] %v1545
        %1645 = vst [vmem:[%s1636 + $0x40] sm:$0xff] %v1548
        %1646 = vst [vmem:[%s1636 + $0x48] sm:$0xff] %v1551
        %1647 = vst [vmem:[%s1636 + $0x50] sm:$0xff] %v1554
        %1648 = vst [vmem:[%s1636 + $0x58] sm:$0xff] %v1557
        %1649 = vst [vmem:[%s1636 + $0x60] sm:$0xff] %v1560
        %1650 = vst [vmem:[%s1636 + $0x68] sm:$0xff] %v1563
        %1651 = vst [vmem:[%s1636 + $0x70] sm:$0xff] %v1566
        %1652 = vst [vmem:[%s1636 + $0x78] sm:$0xff] %v1569
        %s1653 = scalar_lea.vmem %s343, 896 [#allocation6]
        %1654 = vst [vmem:[%s1653] sm:$0xff] %v1589
        %1655 = vst [vmem:[%s1653 + $0x8] sm:$0xff] %v1592
        %1656 = vst [vmem:[%s1653 + $0x10] sm:$0xff] %v1595
        %1657 = vst [vmem:[%s1653 + $0x18] sm:$0xff] %v1598
        %1658 = vst [vmem:[%s1653 + $0x20] sm:$0xff] %v1601
        %1659 = vst [vmem:[%s1653 + $0x28] sm:$0xff] %v1604
        %1660 = vst [vmem:[%s1653 + $0x30] sm:$0xff] %v1607
        %1661 = vst [vmem:[%s1653 + $0x38] sm:$0xff] %v1610
        %1662 = vst [vmem:[%s1653 + $0x40] sm:$0xff] %v1613
        %1663 = vst [vmem:[%s1653 + $0x48] sm:$0xff] %v1616
        %1664 = vst [vmem:[%s1653 + $0x50] sm:$0xff] %v1619
        %1665 = vst [vmem:[%s1653 + $0x58] sm:$0xff] %v1622
        %1666 = vst [vmem:[%s1653 + $0x60] sm:$0xff] %v1625
        %1667 = vst [vmem:[%s1653 + $0x68] sm:$0xff] %v1628
        %1668 = vst [vmem:[%s1653 + $0x70] sm:$0xff] %v1631
        %1669 = vst [vmem:[%s1653 + $0x78] sm:$0xff] %v1634
        %s1670 = sand.u32 %s226, 1
        %s1671 = scalar_lea.sflag [#allocation5], %s1670
        %s1672 = sand.u32 %s226, 1
        %s1673 = smul.addr %s1672, 1024
        %s1674 = scalar_lea.vmem [#allocation6], %s1673
        // Predicated region
        $region61: #{tpu_custom_call.1} parent=55 // pred_check
          %p1675 = pneg %p236
        $region62: #{tpu_custom_call.1} parent=55 // pred_check_branch
          %1677 = sbr.rel (%p1675) target = $region64
        $region63: #{tpu_custom_call.1} parent=55 // pred_region
          %s1678 = smul.u32 4, %s24
          %1680 = vsyncadd %s1671, 0
          %s1681 = smul.addr %s1678, 32
          %s1682 = smul.addr %s1681, 8
          %s1683 = scalar_lea.hbm %s9, %s1682
          %s1684 = sshll.u32 %s1674, 4
          %s1685 = int_to_ptr.vmem [resolvable:$true] %s1684
          %s1686 = sshll.u32 %s1683, 4
          %s1687 = int_to_ptr.hbm [resolvable:$true] %s1686
          %1692 = dma.vmem_to_hbm [thread:$0]  %s1685, 16384, %s1687, %s1671, 128, 128, 8
        $region64: #{tpu_custom_call.1} parent=55 // pred_fallthru
          _
      $region56: #{tpu_custom_call.1} parent=5 // pred_fallthru
        _
      %p1693 = scmp.le.s32.totalorder 2, %s19
      // Predicated region
      $region65: #{tpu_custom_call.1} parent=5 // pred_check
        %p1694 = pneg %p1693
      $region66: #{tpu_custom_call.1} parent=5 // pred_check_branch
        %1696 = sbr.rel (%p1694) target = $region68
      $region67: #{tpu_custom_call.1} parent=5 // pred_region
        %s1697 = ssub.s32 %s19, 2
        // Predicated region
        $region69: #{tpu_custom_call.1} parent=67 // pred_check
          %p1698 = pneg %p242
        $region70: #{tpu_custom_call.1} parent=67 // pred_check_branch
          %1700 = sbr.rel (%p1698) target = $region72
        $region71: #{tpu_custom_call.1} parent=67 // pred_region
          %s1701 = sand.u32 %s227, 1
          %s1702 = scalar_lea.sflag [#allocation5], %s1701
          %s1703 = sand.u32 %s227, 1
          %s1704 = smul.addr %s1703, 1024
          %s1705 = scalar_lea.vmem [#allocation6], %s1704
          %1707 = dma.done %s1702, 16384
        $region72: #{tpu_custom_call.1} parent=67 // pred_fallthru
          _
      $region68: #{tpu_custom_call.1} parent=5 // pred_fallthru
        _
    $region6: #{tpu_custom_call.1} parent=1 // loop_footer
      %s23 = sadd.s32 1, %s19
    $region7: #{tpu_custom_call.1} parent=1 // loop_footer_branch
      %18 = sbr.rel target = $region3
    $region8: #{tpu_custom_call.1} parent=1 // loop_exit
      _
    %1708 = vsyncpa [#allocation4], 1
    %s1709 = scalar_lea.sflag [#allocation4], 1
    %1710 = vsyncpa %s1709, 1
    %1711 = vsyncpa [#allocation5], 1
    %s1712 = scalar_lea.sflag [#allocation5], 1
    %1713 = vsyncpa %s1712, 1

</llo_original>
